<compile_context>
chip_gen: v5e
topology: v5e:2x2
jax: 0.10.0
libtpu: 0.0.40
codegen_flags: <defaults>
</compile_context>

<pallas_src>
import functools

import numpy as np
import jax
import jax.numpy as jnp
from jax.experimental import pallas as pl
from jax.experimental.pallas import tpu as pltpu

# ----------------------------- model configuration ---------------------------
VOCAB_SIZE = 64
BLOCK_SIZE = 16
N_EMBD = 32
N_HEAD = 4
N_LAYER = 2
HEAD_DIM = N_EMBD // N_HEAD
BATCH = 2
SEQ = 8
EPS = 1e-5
ATTN_SCALE = 8.0 / N_EMBD          # SelfAttention uses scale = 8 / n_embd
NEG_INF = -1e30
LM_PAD = 128                       # lm_head lane-padded to 128 for unmasked stores
CONST_ROWS_PER_LAYER = 8           # ln1_w, ln1_b, b_qkv, b_pr, ln2_w, ln2_b, b_fc, b_p2
WLANES_PER_LAYER = 12 * N_EMBD     # [w_fc(4C) | w_mlp_projT(4C) | w_qkv(3C) | w_attn_proj(C)]


# ------------------------------ shared math helpers ---------------------------
def _layernorm(x, w, b):
    # F.layer_norm over last dim, eps=1e-5 (biased variance), affine w, b.
    mu = jnp.mean(x, axis=-1, keepdims=True)
    var = jnp.mean((x - mu) ** 2, axis=-1, keepdims=True)
    return (x - mu) * jax.lax.rsqrt(var + EPS) * w + b


def _gelu_tanh(x):
    # tanh-form GELU -> transcendental lands on the EUP; matches the torch erf
    # fused_gelu to ~1e-3 abs, well inside the test tolerance.
    c = 0.7978845608028654  # sqrt(2/pi)
    return 0.5 * x * (1.0 + jnp.tanh(c * (x + 0.044715 * x * x * x)))


# ------------------------------ fused Pallas kernel ----------------------------
def fused_forward_kernel(n_layer, n_head, B, T,
                         idx_ref, cs_ref, consts_ref, wte_ref, swap_ref, wts_ref,
                         o_ref):
    """Entire forward: embedding -> n_layer Blocks -> final LN -> lm_head.

    Operands:
      idx_ref    (B*T, 1)  int32   token ids
      cs_ref     (B*T, 4C) f32     [cos|cos | sin|sin] RoPE tables for the [q|k] lanes
      consts_ref (8L+2,128) f32    packed LN weights/biases + linear biases + final LN
      wte_ref    (V, C)    bf16    token embedding table
      swap_ref   (2C, 2C)  bf16    block-diag even/odd pair-swap for RoPE on [q|k]
      wts_ref    (C, 12C*L + 128) bf16  packed matmul weights + lane-padded lm_head
      o_ref      (B*T, 128) f32    lane-padded logits
    """
    BT = B * T
    V, C = wte_ref.shape
    H = n_head
    D = C // H
    HBT = H * BT

    # power-of-two shifts for the in-kernel mask iotas (config guarantees this)
    assert (T & (T - 1)) == 0 and (BT & (BT - 1)) == 0 and (D & (D - 1)) == 0
    log_t = T.bit_length() - 1
    log_bt = BT.bit_length() - 1
    log_d = D.bit_length() - 1

    # ---- token embedding: one_hot(idx) @ wte, both bf16 -> single MXU pass ----
    ids = idx_ref[...]                                              # (BT, 1) int32
    cols = jax.lax.broadcasted_iota(jnp.int32, (BT, V), 1)
    onehot = jnp.where(cols == ids, 1.0, 0.0).astype(jnp.bfloat16)
    x = jnp.dot(onehot, wte_ref[...], preferred_element_type=jnp.float32)  # (BT, C) f32

    # ---- RoPE tables and pair-swap matrix (hoisted, used every layer) ----------
    cs = cs_ref[...]
    cos2 = cs[:, :2 * C]                 # (BT, 2C) for the [q|k] lanes
    sin2 = cs[:, 2 * C:4 * C]            # signed: (-sin, +sin) interleaved
    swapm = swap_ref[...]                # (2C, 2C) bf16, exact 0/1

    # ---- masks built once from iota (no DMA'd mask tables, scale-free) ---------
    # cross-batch mask on scores laid out as (query t, h*BT + key j)
    qrow = jax.lax.broadcasted_iota(jnp.int32, (BT, HBT), 0)
    kcol = jax.lax.broadcasted_iota(jnp.int32, (BT, HBT), 1)
    same_batch = (jnp.right_shift(qrow, log_t) ==
                  jnp.right_shift(jnp.bitwise_and(kcol, BT - 1), log_t))
    # head selector for head-stacked K/V: row h*BT+j owns lanes of head h only
    hrow = jax.lax.broadcasted_iota(jnp.int32, (HBT, C), 0)
    hcol = jax.lax.broadcasted_iota(jnp.int32, (HBT, C), 1)
    head_mask = jnp.where(jnp.right_shift(hrow, log_bt) == jnp.right_shift(hcol, log_d),
                          1.0, 0.0)                                  # (HBT, C) f32
    head_mask_bf = head_mask.astype(jnp.bfloat16)

    for l in range(n_layer):
        cb = l * CONST_ROWS_PER_LAYER
        wb = l * WLANES_PER_LAYER
        ln1w = consts_ref[cb + 0:cb + 1, :C]
        ln1b = consts_ref[cb + 1:cb + 2, :C]
        bqkv = consts_ref[cb + 2:cb + 3, :3 * C]
        bpr = consts_ref[cb + 3:cb + 4, :C]
        ln2w = consts_ref[cb + 4:cb + 5, :C]
        ln2b = consts_ref[cb + 5:cb + 6, :C]
        bfc = consts_ref[cb + 6:cb + 7, :4 * C]
        bp2 = consts_ref[cb + 7:cb + 8, :C]
        wfc = wts_ref[:, wb:wb + 4 * C]                      # (C, 4C)
        wp2t = wts_ref[:, wb + 4 * C:wb + 8 * C]             # (C, 4C) = w_mlp_proj^T
        wqkv = wts_ref[:, wb + 8 * C:wb + 11 * C]            # (C, 3C), scale folded in q
        wpr = wts_ref[:, wb + 11 * C:wb + 12 * C]            # (C, C)

        # ---------------- attention branch ----------------
        h1 = _layernorm(x, ln1w, ln1b)
        qkv = jnp.dot(h1.astype(jnp.bfloat16), wqkv,
                      preferred_element_type=jnp.float32) + bqkv       # (BT, 3C)

        # RoPE on q|k jointly; the attention scale 8/C is pre-folded into the q
        # columns of wqkv/bqkv (RoPE is a rotation, so the scale commutes).
        qk = qkv[:, :2 * C]
        qk_sw = jnp.dot(qk.astype(jnp.bfloat16), swapm,
                        preferred_element_type=jnp.float32)
        qk = qk * cos2 + qk_sw * sin2
        q = qk[:, :C]
        k = qk[:, C:2 * C]
        v = qkv[:, 2 * C:3 * C]

        # head-stacked masked K / V: (H*BT, C); pointwise prep in f32, cast for MXU
        ks = (jnp.concatenate([k] * H, axis=0) * head_mask).astype(jnp.bfloat16)
        vs = (jnp.concatenate([v] * H, axis=0) * head_mask).astype(jnp.bfloat16)

        # one (BT, H*BT) score matmul covering all heads (masked K -> per-head dots)
        s = jax.lax.dot_general(q.astype(jnp.bfloat16), ks,
                                (((1,), (1,)), ((), ())),
                                preferred_element_type=jnp.float32)
        # single softmax chain: one max, one exp, one reciprocal per layer
        smax = jnp.max(jnp.where(same_batch, s, NEG_INF), axis=-1, keepdims=True)
        p = jnp.where(same_batch, jnp.exp(s - smax), 0.0).astype(jnp.bfloat16)
        y_num = jnp.dot(p, vs, preferred_element_type=jnp.float32)         # (BT, C)
        y_den = jnp.dot(p, head_mask_bf, preferred_element_type=jnp.float32)
        y = y_num * pl.reciprocal(y_den, approx=True)

        y = jnp.dot(y.astype(jnp.bfloat16), wpr,
                    preferred_element_type=jnp.float32) + bpr
        x = x + y

        # ---------------- MLP branch ----------------
        h2 = _layernorm(x, ln2w, ln2b)
        a = jnp.dot(h2.astype(jnp.bfloat16), wfc,
                    preferred_element_type=jnp.float32) + bfc              # (BT, 4C)
        g = _gelu_tanh(a)
        m = jax.lax.dot_general(g.astype(jnp.bfloat16), wp2t,
                                (((1,), (1,)), ((), ())),
                                preferred_element_type=jnp.float32) + bp2
        x = x + m

    # ---------------- final LayerNorm + lane-padded lm_head ----------------
    fr = n_layer * CONST_ROWS_PER_LAYER
    emb = _layernorm(x, consts_ref[fr:fr + 1, :C], consts_ref[fr + 1:fr + 2, :C])
    wlm = wts_ref[:, n_layer * WLANES_PER_LAYER:n_layer * WLANES_PER_LAYER + LM_PAD]
    o_ref[...] = jnp.dot(emb.astype(jnp.bfloat16), wlm,
                         preferred_element_type=jnp.float32)


# ------------------------------ wrapper ----------------------------------------
def _vmem_spec():
    return pl.BlockSpec(memory_space=pltpu.MemorySpace.VMEM)


@jax.jit
def omnibiota_forward(idx, kernel_inputs):
    B, T = idx.shape
    idx2d = idx.reshape(B * T, 1).astype(jnp.int32)
    args = (idx2d,) + tuple(kernel_inputs)
    logits_pad = pl.pallas_call(
        functools.partial(fused_forward_kernel, N_LAYER, N_HEAD, B, T),
        out_shape=jax.ShapeDtypeStruct((B * T, LM_PAD), jnp.float32),
        in_specs=[_vmem_spec() for _ in args],
        out_specs=_vmem_spec(),
    )(*args)
    # TODO(synk): for large B*T, add a row-tile grid with
    #   dimension_semantics=("parallel",) (engages v7x's 2nd TensorCore), keep the
    #   packed-weight BlockSpecs constant so weights stay VMEM-resident, and budget
    #   against 64 MiB VMEM. At B*T=16 a single ungridded call is optimal.
    return logits_pad[:, :VOCAB_SIZE].reshape(B, T, VOCAB_SIZE)


# ------------------------------ parameters & tables -----------------------------
def init_params(key):
    keys = jax.random.split(key, 4 + 10 * N_LAYER)
    it = iter(keys)

    def nrm(shape, scale=0.02):
        return (scale * jax.random.normal(next(it), shape)).astype(jnp.float32)

    params = {
        'wte': nrm((VOCAB_SIZE, N_EMBD)),
        'lnf_w': jnp.ones((1, N_EMBD), jnp.float32),
        'lnf_b': jnp.zeros((1, N_EMBD), jnp.float32),
        'w_lm': nrm((N_EMBD, VOCAB_SIZE)),
        'layers': [],
    }
    for _ in range(N_LAYER):
        params['layers'].append({
            'ln1_w': jnp.ones((1, N_EMBD), jnp.float32),
            'ln1_b': jnp.zeros((1, N_EMBD), jnp.float32),
            'w_qkv': nrm((N_EMBD, 3 * N_EMBD)),
            'b_qkv': nrm((1, 3 * N_EMBD)),
            'w_attn_proj': nrm((N_EMBD, N_EMBD)),
            'b_attn_proj': nrm((1, N_EMBD)),
            'ln2_w': jnp.ones((1, N_EMBD), jnp.float32),
            'ln2_b': jnp.zeros((1, N_EMBD), jnp.float32),
            'w_fc': nrm((N_EMBD, 4 * N_EMBD)),
            'b_fc': nrm((1, 4 * N_EMBD)),
            'w_mlp_proj': nrm((4 * N_EMBD, N_EMBD)),
            'b_mlp_proj': nrm((1, N_EMBD)),
        })
    return params


def rope_tables(T):
    # precompute_freqs_cis(head_dim, block_size)[:T] unrolled into real tables:
    #   out[2i]   = x[2i]*cos - x[2i+1]*sin
    #   out[2i+1] = x[2i]*sin + x[2i+1]*cos
    # expressed as  out = x * cos_full + swap(x) * sin_full.
    half = HEAD_DIM // 2
    inv_freq = 1.0 / (10000.0 ** (np.arange(0, HEAD_DIM, 2)[:half].astype(np.float32)
                                  / HEAD_DIM))
    t = np.arange(T, dtype=np.float32)
    ang = np.outer(t, inv_freq)                                  # (T, half)
    cos = np.cos(ang)
    sin = np.sin(ang)
    cos_full = np.repeat(cos, 2, axis=-1).astype(np.float32)     # (T, D)
    sin_full = np.stack([-sin, sin], axis=-1).reshape(T, HEAD_DIM).astype(np.float32)
    swap = np.zeros((HEAD_DIM, HEAD_DIM), np.float32)
    for i in range(half):
        swap[2 * i + 1, 2 * i] = 1.0
        swap[2 * i, 2 * i + 1] = 1.0
    return cos_full, sin_full, swap


def prepare_kernel_inputs(params, B, T):
    """One-time host prep: pack all small f32 params into one (18,128) array, all
    bf16 matmul weights (incl. a lane-padded lm_head) into one (C, 12C*L+128) array,
    tile RoPE tables for the [q|k] lanes, build the bf16 pair-swap matrix, and fold
    the attention scale into the q columns of the qkv projection."""
    C = N_EMBD
    cos_td, sin_td, swap_dd = rope_tables(T)                      # (T,D), (T,D), (D,D)
    cos_bt = np.tile(np.tile(cos_td, (1, N_HEAD)), (B, 1))        # (B*T, C)
    sin_bt = np.tile(np.tile(sin_td, (1, N_HEAD)), (B, 1))        # (B*T, C)
    rope_cs = np.concatenate([np.tile(cos_bt, (1, 2)),
                              np.tile(sin_bt, (1, 2))], axis=1).astype(np.float32)

    swap2c = np.kron(np.eye(2 * N_HEAD, dtype=np.float32), swap_dd)   # (2C, 2C)

    def row(vec, width):
        r = np.zeros((1, 128), np.float32)
        r[0, :width] = np.array(vec, np.float32).reshape(-1)[:width]
        return r

    const_rows = []
    wcols = []
    for lyr in params['layers']:
        b_qkv = np.array(lyr['b_qkv'], np.float32)
        b_qkv[:, :C] *= ATTN_SCALE
        w_qkv = np.array(lyr['w_qkv'], np.float32)
        w_qkv[:, :C] *= ATTN_SCALE
        const_rows += [row(lyr['ln1_w'], C), row(lyr['ln1_b'], C),
                       row(b_qkv, 3 * C), row(lyr['b_attn_proj'], C),
                       row(lyr['ln2_w'], C), row(lyr['ln2_b'], C),
                       row(lyr['b_fc'], 4 * C), row(lyr['b_mlp_proj'], C)]
        wcols += [np.array(lyr['w_fc'], np.float32),
                  np.array(lyr['w_mlp_proj'], np.float32).T,
                  w_qkv,
                  np.array(lyr['w_attn_proj'], np.float32)]
    const_rows += [row(params['lnf_w'], C), row(params['lnf_b'], C)]
    w_lm_pad = np.zeros((C, LM_PAD), np.float32)
    w_lm_pad[:, :VOCAB_SIZE] = np.array(params['w_lm'], np.float32)
    wcols.append(w_lm_pad)

    consts = jnp.asarray(np.concatenate(const_rows, axis=0))                  # (18,128) f32
    weights = jnp.asarray(np.concatenate(wcols, axis=1)).astype(jnp.bfloat16)  # (C, 896)
    wte_bf = params['wte'].astype(jnp.bfloat16)
    swap_bf = jnp.asarray(swap2c).astype(jnp.bfloat16)
    return (jnp.asarray(rope_cs), consts, wte_bf, swap_bf, weights)


# ------------------------------ pure-JAX reference -----------------------------
def ref_forward(idx, params, cos_t, sin_t, swap):
    from jax.scipy.special import erf
    x = jnp.take(params['wte'], idx, axis=0)
    B, T, C = x.shape
    D = HEAD_DIM
    for lyr in params['layers']:
        h = _layernorm(x, lyr['ln1_w'], lyr['ln1_b'])
        qkv = h.reshape(B * T, C) @ lyr['w_qkv'] + lyr['b_qkv']
        q = qkv[:, :C].reshape(B, T, N_HEAD, D)
        k = qkv[:, C:2 * C].reshape(B, T, N_HEAD, D)
        v = qkv[:, 2 * C:].reshape(B, T, N_HEAD, D)

        def rope(u):
            usw = jnp.einsum('bthd,de->bthe', u, swap)
            return u * cos_t[None, :, None, :] + usw * sin_t[None, :, None, :]

        q, k = rope(q), rope(k)
        att = jnp.einsum('bthd,bshd->bhts', q, k) * ATTN_SCALE
        att = jax.nn.softmax(att, axis=-1)
        y = jnp.einsum('bhts,bshd->bthd', att, v).reshape(B * T, C)
        y = y @ lyr['w_attn_proj'] + lyr['b_attn_proj']
        x = x + y.reshape(B, T, C)

        h2 = _layernorm(x, lyr['ln2_w'], lyr['ln2_b'])
        a = h2.reshape(B * T, C) @ lyr['w_fc'] + lyr['b_fc']
        a = a * 0.5 * (1.0 + erf(a / 1.41421))          # exact torch fused_gelu
        m = a @ lyr['w_mlp_proj'] + lyr['b_mlp_proj']
        x = x + m.reshape(B, T, C)
    emb = _layernorm(x, params['lnf_w'], params['lnf_b'])
    # TODO(synk): MuReadout's mup output scaling (output_mult / width_mult) is not
    #             modeled; lm_head is treated as a plain Linear(bias=False).
    # TODO(synk): torch.utils.checkpoint is a training-time memory trick; forward
    #             semantics are unchanged, so it is omitted.
    return (emb.reshape(B * T, C) @ params['w_lm']).reshape(B, T, VOCAB_SIZE)


# ------------------------------ main ------------------------------------------
if __name__ == "__main__":
    key = jax.random.PRNGKey(0)
    kp, ki = jax.random.split(key)
    params = init_params(kp)
    idx = jax.random.randint(ki, (BATCH, SEQ), 0, VOCAB_SIZE, dtype=jnp.int32)

    kernel_inputs = prepare_kernel_inputs(params, BATCH, SEQ)
    logits = omnibiota_forward(idx, kernel_inputs)
    logits = jax.block_until_ready(logits)

    assert logits.shape == (BATCH, SEQ, VOCAB_SIZE)
    assert bool(jnp.all(jnp.isfinite(logits)))

    cos_td, sin_td, swap_dd = rope_tables(SEQ)
    ref = ref_forward(idx, params, jnp.asarray(cos_td), jnp.asarray(sin_td),
                      jnp.asarray(swap_dd))
    max_err = float(jnp.max(jnp.abs(logits - ref)))
    assert bool(jnp.allclose(logits, ref, rtol=1e-2, atol=1e-2)), max_err

    print("KERNEL_OK")
</pallas_src>

<mosaic_0001>
module attributes {stable_mosaic.version = 11 : i64} {
  func.func @fused_forward_kernel(%arg0: memref<16x1xi32, #tpu.memory_space<vmem>>, %arg1: memref<16x128xf32, #tpu.memory_space<vmem>>, %arg2: memref<18x128xf32, #tpu.memory_space<vmem>>, %arg3: memref<64x32xbf16, #tpu.memory_space<vmem>>, %arg4: memref<64x64xbf16, #tpu.memory_space<vmem>>, %arg5: memref<32x896xbf16, #tpu.memory_space<vmem>>, %arg6: memref<16x128xf32, #tpu.memory_space<vmem>>) attributes {dimension_semantics = [], scalar_prefetch = 0 : i64, scratch_operands = 0 : i64, tpu.core_type = #tpu.core_type<tc>} {
    %c0 = arith.constant 0 : index
    %c0_0 = arith.constant 0 : index
    %0 = vector.load %arg0[%c0, %c0_0] : memref<16x1xi32, #tpu.memory_space<vmem>>, vector<16x1xi32>
    %1 = tpu.iota {dimensions = array<i32: 1>} : vector<16x64xi32>
    %2 = vector.broadcast %0 : vector<16x1xi32> to vector<16x64xi32>
    %3 = arith.cmpi eq, %1, %2 : vector<16x64xi32>
    %cst = arith.constant 1.000000e+00 : f32
    %cst_1 = arith.constant 0.000000e+00 : f32
    %4 = vector.broadcast %cst : f32 to vector<16x64xf32>
    %5 = vector.broadcast %cst_1 : f32 to vector<16x64xf32>
    %6 = arith.select %3, %4, %5 : vector<16x64xi1>, vector<16x64xf32>
    %7 = arith.truncf %6 : vector<16x64xf32> to vector<16x64xbf16>
    %c0_2 = arith.constant 0 : index
    %c0_3 = arith.constant 0 : index
    %8 = vector.load %arg3[%c0_2, %c0_3] : memref<64x32xbf16, #tpu.memory_space<vmem>>, vector<64x32xbf16>
    %cst_4 = arith.constant dense<0.000000e+00> : vector<16x32xf32>
    %9 = tpu.matmul %7, %8, %cst_4 {dimension_numbers = #tpu.dot_dimension_numbers<[1], [0], [0], [1], [0, 0, 1, 1], [], []>} : vector<16x64xbf16>, vector<64x32xbf16>, vector<16x32xf32> -> vector<16x32xf32>
    %c0_5 = arith.constant 0 : index
    %c0_6 = arith.constant 0 : index
    %10 = vector.load %arg1[%c0_5, %c0_6] : memref<16x128xf32, #tpu.memory_space<vmem>>, vector<16x128xf32>
    %11 = vector.extract_strided_slice %10 {offsets = [0, 0], sizes = [16, 64], strides = [1, 1]} : vector<16x128xf32> to vector<16x64xf32>
    %12 = vector.extract_strided_slice %10 {offsets = [0, 64], sizes = [16, 64], strides = [1, 1]} : vector<16x128xf32> to vector<16x64xf32>
    %c0_7 = arith.constant 0 : index
    %c0_8 = arith.constant 0 : index
    %13 = vector.load %arg4[%c0_7, %c0_8] : memref<64x64xbf16, #tpu.memory_space<vmem>>, vector<64x64xbf16>
    %14 = tpu.iota {dimensions = array<i32: 0>} : vector<16x64xi32>
    %15 = tpu.iota {dimensions = array<i32: 1>} : vector<16x64xi32>
    %c3_i32 = arith.constant 3 : i32
    %16 = vector.broadcast %c3_i32 : i32 to vector<16x64xi32>
    %17 = arith.shrsi %14, %16 : vector<16x64xi32>
    %c15_i32 = arith.constant 15 : i32
    %18 = vector.broadcast %c15_i32 : i32 to vector<16x64xi32>
    %19 = arith.andi %15, %18 : vector<16x64xi32>
    %c3_i32_9 = arith.constant 3 : i32
    %20 = vector.broadcast %c3_i32_9 : i32 to vector<16x64xi32>
    %21 = arith.shrsi %19, %20 : vector<16x64xi32>
    %22 = arith.cmpi eq, %17, %21 : vector<16x64xi32>
    %23 = tpu.iota {dimensions = array<i32: 0>} : vector<64x32xi32>
    %24 = tpu.iota {dimensions = array<i32: 1>} : vector<64x32xi32>
    %c4_i32 = arith.constant 4 : i32
    %25 = vector.broadcast %c4_i32 : i32 to vector<64x32xi32>
    %26 = arith.shrsi %23, %25 : vector<64x32xi32>
    %c3_i32_10 = arith.constant 3 : i32
    %27 = vector.broadcast %c3_i32_10 : i32 to vector<64x32xi32>
    %28 = arith.shrsi %24, %27 : vector<64x32xi32>
    %29 = arith.cmpi eq, %26, %28 : vector<64x32xi32>
    %cst_11 = arith.constant 1.000000e+00 : f32
    %cst_12 = arith.constant 0.000000e+00 : f32
    %30 = vector.broadcast %cst_11 : f32 to vector<64x32xf32>
    %31 = vector.broadcast %cst_12 : f32 to vector<64x32xf32>
    %32 = arith.select %29, %30, %31 : vector<64x32xi1>, vector<64x32xf32>
    %33 = arith.truncf %32 : vector<64x32xf32> to vector<64x32xbf16>
    %c0_13 = arith.constant 0 : index
    %c0_14 = arith.constant 0 : index
    %34 = vector.load %arg2[%c0_13, %c0_14] : memref<18x128xf32, #tpu.memory_space<vmem>>, vector<1x32xf32>
    %c1 = arith.constant 1 : index
    %c0_15 = arith.constant 0 : index
    %35 = vector.load %arg2[%c1, %c0_15] : memref<18x128xf32, #tpu.memory_space<vmem>>, vector<1x32xf32>
    %c2 = arith.constant 2 : index
    %c0_16 = arith.constant 0 : index
    %36 = vector.load %arg2[%c2, %c0_16] : memref<18x128xf32, #tpu.memory_space<vmem>>, vector<1x96xf32>
    %c3 = arith.constant 3 : index
    %c0_17 = arith.constant 0 : index
    %37 = vector.load %arg2[%c3, %c0_17] : memref<18x128xf32, #tpu.memory_space<vmem>>, vector<1x32xf32>
    %c4 = arith.constant 4 : index
    %c0_18 = arith.constant 0 : index
    %38 = vector.load %arg2[%c4, %c0_18] : memref<18x128xf32, #tpu.memory_space<vmem>>, vector<1x32xf32>
    %c5 = arith.constant 5 : index
    %c0_19 = arith.constant 0 : index
    %39 = vector.load %arg2[%c5, %c0_19] : memref<18x128xf32, #tpu.memory_space<vmem>>, vector<1x32xf32>
    %c6 = arith.constant 6 : index
    %c0_20 = arith.constant 0 : index
    %40 = vector.load %arg2[%c6, %c0_20] : memref<18x128xf32, #tpu.memory_space<vmem>>, vector<1x128xf32>
    %c7 = arith.constant 7 : index
    %c0_21 = arith.constant 0 : index
    %41 = vector.load %arg2[%c7, %c0_21] : memref<18x128xf32, #tpu.memory_space<vmem>>, vector<1x32xf32>
    %c0_22 = arith.constant 0 : index
    %c0_23 = arith.constant 0 : index
    %42 = vector.load %arg5[%c0_22, %c0_23] : memref<32x896xbf16, #tpu.memory_space<vmem>>, vector<32x128xbf16>
    %c0_24 = arith.constant 0 : index
    %c128 = arith.constant 128 : index
    %43 = vector.load %arg5[%c0_24, %c128] : memref<32x896xbf16, #tpu.memory_space<vmem>>, vector<32x128xbf16>
    %c0_25 = arith.constant 0 : index
    %c256 = arith.constant 256 : index
    %44 = vector.load %arg5[%c0_25, %c256] : memref<32x896xbf16, #tpu.memory_space<vmem>>, vector<32x96xbf16>
    %c0_26 = arith.constant 0 : index
    %c352 = arith.constant 352 : index
    %45 = vector.load %arg5[%c0_26, %c352] : memref<32x896xbf16, #tpu.memory_space<vmem>>, vector<32x32xbf16>
    %cst_27 = arith.constant dense<0.000000e+00> : vector<16xf32>
    %46 = vector.multi_reduction <add>, %9, %cst_27 [1] : vector<16x32xf32> to vector<16xf32>
    %47 = vector.shape_cast %46 : vector<16xf32> to vector<16x1xf32>
    %cst_28 = arith.constant 3.200000e+01 : f32
    %48 = vector.broadcast %cst_28 : f32 to vector<16x1xf32>
    %49 = arith.divf %47, %48 : vector<16x1xf32>
    %50 = vector.broadcast %49 : vector<16x1xf32> to vector<16x32xf32>
    %51 = arith.subf %9, %50 : vector<16x32xf32>
    %52 = arith.mulf %51, %51 : vector<16x32xf32>
    %cst_29 = arith.constant dense<0.000000e+00> : vector<16xf32>
    %53 = vector.multi_reduction <add>, %52, %cst_29 [1] : vector<16x32xf32> to vector<16xf32>
    %54 = vector.shape_cast %53 : vector<16xf32> to vector<16x1xf32>
    %cst_30 = arith.constant 3.200000e+01 : f32
    %55 = vector.broadcast %cst_30 : f32 to vector<16x1xf32>
    %56 = arith.divf %54, %55 : vector<16x1xf32>
    %57 = vector.broadcast %49 : vector<16x1xf32> to vector<16x32xf32>
    %58 = arith.subf %9, %57 : vector<16x32xf32>
    %cst_31 = arith.constant 9.99999974E-6 : f32
    %59 = vector.broadcast %cst_31 : f32 to vector<16x1xf32>
    %60 = arith.addf %56, %59 : vector<16x1xf32>
    %61 = math.rsqrt %60 : vector<16x1xf32>
    %62 = vector.broadcast %61 : vector<16x1xf32> to vector<16x32xf32>
    %63 = arith.mulf %58, %62 : vector<16x32xf32>
    %64 = vector.broadcast %34 : vector<1x32xf32> to vector<16x32xf32>
    %65 = arith.mulf %63, %64 : vector<16x32xf32>
    %66 = vector.broadcast %35 : vector<1x32xf32> to vector<16x32xf32>
    %67 = arith.addf %65, %66 : vector<16x32xf32>
    %68 = arith.truncf %67 : vector<16x32xf32> to vector<16x32xbf16>
    %cst_32 = arith.constant dense<0.000000e+00> : vector<16x96xf32>
    %69 = tpu.matmul %68, %44, %cst_32 {dimension_numbers = #tpu.dot_dimension_numbers<[1], [0], [0], [1], [0, 0, 1, 1], [], []>} : vector<16x32xbf16>, vector<32x96xbf16>, vector<16x96xf32> -> vector<16x96xf32>
    %70 = vector.broadcast %36 : vector<1x96xf32> to vector<16x96xf32>
    %71 = arith.addf %69, %70 : vector<16x96xf32>
    %72 = vector.extract_strided_slice %71 {offsets = [0, 0], sizes = [16, 64], strides = [1, 1]} : vector<16x96xf32> to vector<16x64xf32>
    %73 = arith.truncf %72 : vector<16x64xf32> to vector<16x64xbf16>
    %cst_33 = arith.constant dense<0.000000e+00> : vector<16x64xf32>
    %74 = tpu.matmul %73, %13, %cst_33 {dimension_numbers = #tpu.dot_dimension_numbers<[1], [0], [0], [1], [0, 0, 1, 1], [], []>} : vector<16x64xbf16>, vector<64x64xbf16>, vector<16x64xf32> -> vector<16x64xf32>
    %75 = arith.mulf %72, %11 : vector<16x64xf32>
    %76 = arith.mulf %74, %12 : vector<16x64xf32>
    %77 = arith.addf %75, %76 : vector<16x64xf32>
    %78 = vector.extract_strided_slice %77 {offsets = [0, 0], sizes = [16, 32], strides = [1, 1]} : vector<16x64xf32> to vector<16x32xf32>
    %79 = vector.extract_strided_slice %77 {offsets = [0, 32], sizes = [16, 32], strides = [1, 1]} : vector<16x64xf32> to vector<16x32xf32>
    %80 = vector.extract_strided_slice %71 {offsets = [0, 64], sizes = [16, 32], strides = [1, 1]} : vector<16x96xf32> to vector<16x32xf32>
    %81 = tpu.concatenate %79, %79, %79, %79 in 0 : vector<16x32xf32>, vector<16x32xf32>, vector<16x32xf32>, vector<16x32xf32> -> vector<64x32xf32>
    %82 = arith.mulf %81, %32 : vector<64x32xf32>
    %83 = arith.truncf %82 : vector<64x32xf32> to vector<64x32xbf16>
    %84 = tpu.concatenate %80, %80, %80, %80 in 0 : vector<16x32xf32>, vector<16x32xf32>, vector<16x32xf32>, vector<16x32xf32> -> vector<64x32xf32>
    %85 = arith.mulf %84, %32 : vector<64x32xf32>
    %86 = arith.truncf %85 : vector<64x32xf32> to vector<64x32xbf16>
    %87 = arith.truncf %78 : vector<16x32xf32> to vector<16x32xbf16>
    %cst_34 = arith.constant dense<0.000000e+00> : vector<16x64xf32>
    %88 = tpu.matmul %87, %83, %cst_34 {dimension_numbers = #tpu.dot_dimension_numbers<[1], [1], [0], [0], [0, 0, 1, 0], [], []>} : vector<16x32xbf16>, vector<64x32xbf16>, vector<16x64xf32> -> vector<16x64xf32>
    %cst_35 = arith.constant -1.000000e+30 : f32
    %89 = vector.broadcast %cst_35 : f32 to vector<16x64xf32>
    %90 = arith.select %22, %88, %89 : vector<16x64xi1>, vector<16x64xf32>
    %cst_36 = arith.constant dense<0xFF800000> : vector<16xf32>
    %91 = vector.multi_reduction <maximumf>, %90, %cst_36 [1] : vector<16x64xf32> to vector<16xf32>
    %92 = vector.shape_cast %91 : vector<16xf32> to vector<16x1xf32>
    %93 = vector.broadcast %92 : vector<16x1xf32> to vector<16x64xf32>
    %94 = arith.subf %88, %93 : vector<16x64xf32>
    %95 = math.exp %94 : vector<16x64xf32>
    %cst_37 = arith.constant 0.000000e+00 : f32
    %96 = vector.broadcast %cst_37 : f32 to vector<16x64xf32>
    %97 = arith.select %22, %95, %96 : vector<16x64xi1>, vector<16x64xf32>
    %98 = arith.truncf %97 : vector<16x64xf32> to vector<16x64xbf16>
    %cst_38 = arith.constant dense<0.000000e+00> : vector<16x32xf32>
    %99 = tpu.matmul %98, %86, %cst_38 {dimension_numbers = #tpu.dot_dimension_numbers<[1], [0], [0], [1], [0, 0, 1, 1], [], []>} : vector<16x64xbf16>, vector<64x32xbf16>, vector<16x32xf32> -> vector<16x32xf32>
    %cst_39 = arith.constant dense<0.000000e+00> : vector<16x32xf32>
    %100 = tpu.matmul %98, %33, %cst_39 {dimension_numbers = #tpu.dot_dimension_numbers<[1], [0], [0], [1], [0, 0, 1, 1], [], []>} : vector<16x64xbf16>, vector<64x32xbf16>, vector<16x32xf32> -> vector<16x32xf32>
    %101 = tpu.reciprocal %100 {approx = true} : vector<16x32xf32> -> vector<16x32xf32>
    %102 = arith.mulf %99, %101 : vector<16x32xf32>
    %103 = arith.truncf %102 : vector<16x32xf32> to vector<16x32xbf16>
    %cst_40 = arith.constant dense<0.000000e+00> : vector<16x32xf32>
    %104 = tpu.matmul %103, %45, %cst_40 {dimension_numbers = #tpu.dot_dimension_numbers<[1], [0], [0], [1], [0, 0, 1, 1], [], []>} : vector<16x32xbf16>, vector<32x32xbf16>, vector<16x32xf32> -> vector<16x32xf32>
    %105 = vector.broadcast %37 : vector<1x32xf32> to vector<16x32xf32>
    %106 = arith.addf %104, %105 : vector<16x32xf32>
    %107 = arith.addf %9, %106 : vector<16x32xf32>
    %cst_41 = arith.constant dense<0.000000e+00> : vector<16xf32>
    %108 = vector.multi_reduction <add>, %107, %cst_41 [1] : vector<16x32xf32> to vector<16xf32>
    %109 = vector.shape_cast %108 : vector<16xf32> to vector<16x1xf32>
    %cst_42 = arith.constant 3.200000e+01 : f32
    %110 = vector.broadcast %cst_42 : f32 to vector<16x1xf32>
    %111 = arith.divf %109, %110 : vector<16x1xf32>
    %112 = vector.broadcast %111 : vector<16x1xf32> to vector<16x32xf32>
    %113 = arith.subf %107, %112 : vector<16x32xf32>
    %114 = arith.mulf %113, %113 : vector<16x32xf32>
    %cst_43 = arith.constant dense<0.000000e+00> : vector<16xf32>
    %115 = vector.multi_reduction <add>, %114, %cst_43 [1] : vector<16x32xf32> to vector<16xf32>
    %116 = vector.shape_cast %115 : vector<16xf32> to vector<16x1xf32>
    %cst_44 = arith.constant 3.200000e+01 : f32
    %117 = vector.broadcast %cst_44 : f32 to vector<16x1xf32>
    %118 = arith.divf %116, %117 : vector<16x1xf32>
    %119 = vector.broadcast %111 : vector<16x1xf32> to vector<16x32xf32>
    %120 = arith.subf %107, %119 : vector<16x32xf32>
    %cst_45 = arith.constant 9.99999974E-6 : f32
    %121 = vector.broadcast %cst_45 : f32 to vector<16x1xf32>
    %122 = arith.addf %118, %121 : vector<16x1xf32>
    %123 = math.rsqrt %122 : vector<16x1xf32>
    %124 = vector.broadcast %123 : vector<16x1xf32> to vector<16x32xf32>
    %125 = arith.mulf %120, %124 : vector<16x32xf32>
    %126 = vector.broadcast %38 : vector<1x32xf32> to vector<16x32xf32>
    %127 = arith.mulf %125, %126 : vector<16x32xf32>
    %128 = vector.broadcast %39 : vector<1x32xf32> to vector<16x32xf32>
    %129 = arith.addf %127, %128 : vector<16x32xf32>
    %130 = arith.truncf %129 : vector<16x32xf32> to vector<16x32xbf16>
    %cst_46 = arith.constant dense<0.000000e+00> : vector<16x128xf32>
    %131 = tpu.matmul %130, %42, %cst_46 {dimension_numbers = #tpu.dot_dimension_numbers<[1], [0], [0], [1], [0, 0, 1, 1], [], []>} : vector<16x32xbf16>, vector<32x128xbf16>, vector<16x128xf32> -> vector<16x128xf32>
    %132 = vector.broadcast %40 : vector<1x128xf32> to vector<16x128xf32>
    %133 = arith.addf %131, %132 : vector<16x128xf32>
    %cst_47 = arith.constant 5.000000e-01 : f32
    %134 = vector.broadcast %cst_47 : f32 to vector<16x128xf32>
    %135 = arith.mulf %134, %133 : vector<16x128xf32>
    %cst_48 = arith.constant 4.471500e-02 : f32
    %136 = vector.broadcast %cst_48 : f32 to vector<16x128xf32>
    %137 = arith.mulf %136, %133 : vector<16x128xf32>
    %138 = arith.mulf %137, %133 : vector<16x128xf32>
    %139 = arith.mulf %138, %133 : vector<16x128xf32>
    %140 = arith.addf %133, %139 : vector<16x128xf32>
    %cst_49 = arith.constant 0.797884583 : f32
    %141 = vector.broadcast %cst_49 : f32 to vector<16x128xf32>
    %142 = arith.mulf %141, %140 : vector<16x128xf32>
    %143 = math.tanh %142 : vector<16x128xf32>
    %cst_50 = arith.constant 1.000000e+00 : f32
    %144 = vector.broadcast %cst_50 : f32 to vector<16x128xf32>
    %145 = arith.addf %144, %143 : vector<16x128xf32>
    %146 = arith.mulf %135, %145 : vector<16x128xf32>
    %147 = arith.truncf %146 : vector<16x128xf32> to vector<16x128xbf16>
    %cst_51 = arith.constant dense<0.000000e+00> : vector<16x32xf32>
    %148 = tpu.matmul %147, %43, %cst_51 {dimension_numbers = #tpu.dot_dimension_numbers<[1], [1], [0], [0], [0, 0, 1, 0], [], []>} : vector<16x128xbf16>, vector<32x128xbf16>, vector<16x32xf32> -> vector<16x32xf32>
    %149 = vector.broadcast %41 : vector<1x32xf32> to vector<16x32xf32>
    %150 = arith.addf %148, %149 : vector<16x32xf32>
    %151 = arith.addf %107, %150 : vector<16x32xf32>
    %c8 = arith.constant 8 : index
    %c0_52 = arith.constant 0 : index
    %152 = vector.load %arg2[%c8, %c0_52] : memref<18x128xf32, #tpu.memory_space<vmem>>, vector<1x32xf32>
    %c9 = arith.constant 9 : index
    %c0_53 = arith.constant 0 : index
    %153 = vector.load %arg2[%c9, %c0_53] : memref<18x128xf32, #tpu.memory_space<vmem>>, vector<1x32xf32>
    %c10 = arith.constant 10 : index
    %c0_54 = arith.constant 0 : index
    %154 = vector.load %arg2[%c10, %c0_54] : memref<18x128xf32, #tpu.memory_space<vmem>>, vector<1x96xf32>
    %c11 = arith.constant 11 : index
    %c0_55 = arith.constant 0 : index
    %155 = vector.load %arg2[%c11, %c0_55] : memref<18x128xf32, #tpu.memory_space<vmem>>, vector<1x32xf32>
    %c12 = arith.constant 12 : index
    %c0_56 = arith.constant 0 : index
    %156 = vector.load %arg2[%c12, %c0_56] : memref<18x128xf32, #tpu.memory_space<vmem>>, vector<1x32xf32>
    %c13 = arith.constant 13 : index
    %c0_57 = arith.constant 0 : index
    %157 = vector.load %arg2[%c13, %c0_57] : memref<18x128xf32, #tpu.memory_space<vmem>>, vector<1x32xf32>
    %c14 = arith.constant 14 : index
    %c0_58 = arith.constant 0 : index
    %158 = vector.load %arg2[%c14, %c0_58] : memref<18x128xf32, #tpu.memory_space<vmem>>, vector<1x128xf32>
    %c15 = arith.constant 15 : index
    %c0_59 = arith.constant 0 : index
    %159 = vector.load %arg2[%c15, %c0_59] : memref<18x128xf32, #tpu.memory_space<vmem>>, vector<1x32xf32>
    %c0_60 = arith.constant 0 : index
    %c384 = arith.constant 384 : index
    %160 = vector.load %arg5[%c0_60, %c384] : memref<32x896xbf16, #tpu.memory_space<vmem>>, vector<32x128xbf16>
    %c0_61 = arith.constant 0 : index
    %c512 = arith.constant 512 : index
    %161 = vector.load %arg5[%c0_61, %c512] : memref<32x896xbf16, #tpu.memory_space<vmem>>, vector<32x128xbf16>
    %c0_62 = arith.constant 0 : index
    %c640 = arith.constant 640 : index
    %162 = vector.load %arg5[%c0_62, %c640] : memref<32x896xbf16, #tpu.memory_space<vmem>>, vector<32x96xbf16>
    %c0_63 = arith.constant 0 : index
    %c736 = arith.constant 736 : index
    %163 = vector.load %arg5[%c0_63, %c736] : memref<32x896xbf16, #tpu.memory_space<vmem>>, vector<32x32xbf16>
    %cst_64 = arith.constant dense<0.000000e+00> : vector<16xf32>
    %164 = vector.multi_reduction <add>, %151, %cst_64 [1] : vector<16x32xf32> to vector<16xf32>
    %165 = vector.shape_cast %164 : vector<16xf32> to vector<16x1xf32>
    %cst_65 = arith.constant 3.200000e+01 : f32
    %166 = vector.broadcast %cst_65 : f32 to vector<16x1xf32>
    %167 = arith.divf %165, %166 : vector<16x1xf32>
    %168 = vector.broadcast %167 : vector<16x1xf32> to vector<16x32xf32>
    %169 = arith.subf %151, %168 : vector<16x32xf32>
    %170 = arith.mulf %169, %169 : vector<16x32xf32>
    %cst_66 = arith.constant dense<0.000000e+00> : vector<16xf32>
    %171 = vector.multi_reduction <add>, %170, %cst_66 [1] : vector<16x32xf32> to vector<16xf32>
    %172 = vector.shape_cast %171 : vector<16xf32> to vector<16x1xf32>
    %cst_67 = arith.constant 3.200000e+01 : f32
    %173 = vector.broadcast %cst_67 : f32 to vector<16x1xf32>
    %174 = arith.divf %172, %173 : vector<16x1xf32>
    %175 = vector.broadcast %167 : vector<16x1xf32> to vector<16x32xf32>
    %176 = arith.subf %151, %175 : vector<16x32xf32>
    %cst_68 = arith.constant 9.99999974E-6 : f32
    %177 = vector.broadcast %cst_68 : f32 to vector<16x1xf32>
    %178 = arith.addf %174, %177 : vector<16x1xf32>
    %179 = math.rsqrt %178 : vector<16x1xf32>
    %180 = vector.broadcast %179 : vector<16x1xf32> to vector<16x32xf32>
    %181 = arith.mulf %176, %180 : vector<16x32xf32>
    %182 = vector.broadcast %152 : vector<1x32xf32> to vector<16x32xf32>
    %183 = arith.mulf %181, %182 : vector<16x32xf32>
    %184 = vector.broadcast %153 : vector<1x32xf32> to vector<16x32xf32>
    %185 = arith.addf %183, %184 : vector<16x32xf32>
    %186 = arith.truncf %185 : vector<16x32xf32> to vector<16x32xbf16>
    %cst_69 = arith.constant dense<0.000000e+00> : vector<16x96xf32>
    %187 = tpu.matmul %186, %162, %cst_69 {dimension_numbers = #tpu.dot_dimension_numbers<[1], [0], [0], [1], [0, 0, 1, 1], [], []>} : vector<16x32xbf16>, vector<32x96xbf16>, vector<16x96xf32> -> vector<16x96xf32>
    %188 = vector.broadcast %154 : vector<1x96xf32> to vector<16x96xf32>
    %189 = arith.addf %187, %188 : vector<16x96xf32>
    %190 = vector.extract_strided_slice %189 {offsets = [0, 0], sizes = [16, 64], strides = [1, 1]} : vector<16x96xf32> to vector<16x64xf32>
    %191 = arith.truncf %190 : vector<16x64xf32> to vector<16x64xbf16>
    %cst_70 = arith.constant dense<0.000000e+00> : vector<16x64xf32>
    %192 = tpu.matmul %191, %13, %cst_70 {dimension_numbers = #tpu.dot_dimension_numbers<[1], [0], [0], [1], [0, 0, 1, 1], [], []>} : vector<16x64xbf16>, vector<64x64xbf16>, vector<16x64xf32> -> vector<16x64xf32>
    %193 = arith.mulf %190, %11 : vector<16x64xf32>
    %194 = arith.mulf %192, %12 : vector<16x64xf32>
    %195 = arith.addf %193, %194 : vector<16x64xf32>
    %196 = vector.extract_strided_slice %195 {offsets = [0, 0], sizes = [16, 32], strides = [1, 1]} : vector<16x64xf32> to vector<16x32xf32>
    %197 = vector.extract_strided_slice %195 {offsets = [0, 32], sizes = [16, 32], strides = [1, 1]} : vector<16x64xf32> to vector<16x32xf32>
    %198 = vector.extract_strided_slice %189 {offsets = [0, 64], sizes = [16, 32], strides = [1, 1]} : vector<16x96xf32> to vector<16x32xf32>
    %199 = tpu.concatenate %197, %197, %197, %197 in 0 : vector<16x32xf32>, vector<16x32xf32>, vector<16x32xf32>, vector<16x32xf32> -> vector<64x32xf32>
    %200 = arith.mulf %199, %32 : vector<64x32xf32>
    %201 = arith.truncf %200 : vector<64x32xf32> to vector<64x32xbf16>
    %202 = tpu.concatenate %198, %198, %198, %198 in 0 : vector<16x32xf32>, vector<16x32xf32>, vector<16x32xf32>, vector<16x32xf32> -> vector<64x32xf32>
    %203 = arith.mulf %202, %32 : vector<64x32xf32>
    %204 = arith.truncf %203 : vector<64x32xf32> to vector<64x32xbf16>
    %205 = arith.truncf %196 : vector<16x32xf32> to vector<16x32xbf16>
    %cst_71 = arith.constant dense<0.000000e+00> : vector<16x64xf32>
    %206 = tpu.matmul %205, %201, %cst_71 {dimension_numbers = #tpu.dot_dimension_numbers<[1], [1], [0], [0], [0, 0, 1, 0], [], []>} : vector<16x32xbf16>, vector<64x32xbf16>, vector<16x64xf32> -> vector<16x64xf32>
    %cst_72 = arith.constant -1.000000e+30 : f32
    %207 = vector.broadcast %cst_72 : f32 to vector<16x64xf32>
    %208 = arith.select %22, %206, %207 : vector<16x64xi1>, vector<16x64xf32>
    %cst_73 = arith.constant dense<0xFF800000> : vector<16xf32>
    %209 = vector.multi_reduction <maximumf>, %208, %cst_73 [1] : vector<16x64xf32> to vector<16xf32>
    %210 = vector.shape_cast %209 : vector<16xf32> to vector<16x1xf32>
    %211 = vector.broadcast %210 : vector<16x1xf32> to vector<16x64xf32>
    %212 = arith.subf %206, %211 : vector<16x64xf32>
    %213 = math.exp %212 : vector<16x64xf32>
    %cst_74 = arith.constant 0.000000e+00 : f32
    %214 = vector.broadcast %cst_74 : f32 to vector<16x64xf32>
    %215 = arith.select %22, %213, %214 : vector<16x64xi1>, vector<16x64xf32>
    %216 = arith.truncf %215 : vector<16x64xf32> to vector<16x64xbf16>
    %cst_75 = arith.constant dense<0.000000e+00> : vector<16x32xf32>
    %217 = tpu.matmul %216, %204, %cst_75 {dimension_numbers = #tpu.dot_dimension_numbers<[1], [0], [0], [1], [0, 0, 1, 1], [], []>} : vector<16x64xbf16>, vector<64x32xbf16>, vector<16x32xf32> -> vector<16x32xf32>
    %cst_76 = arith.constant dense<0.000000e+00> : vector<16x32xf32>
    %218 = tpu.matmul %216, %33, %cst_76 {dimension_numbers = #tpu.dot_dimension_numbers<[1], [0], [0], [1], [0, 0, 1, 1], [], []>} : vector<16x64xbf16>, vector<64x32xbf16>, vector<16x32xf32> -> vector<16x32xf32>
    %219 = tpu.reciprocal %218 {approx = true} : vector<16x32xf32> -> vector<16x32xf32>
    %220 = arith.mulf %217, %219 : vector<16x32xf32>
    %221 = arith.truncf %220 : vector<16x32xf32> to vector<16x32xbf16>
    %cst_77 = arith.constant dense<0.000000e+00> : vector<16x32xf32>
    %222 = tpu.matmul %221, %163, %cst_77 {dimension_numbers = #tpu.dot_dimension_numbers<[1], [0], [0], [1], [0, 0, 1, 1], [], []>} : vector<16x32xbf16>, vector<32x32xbf16>, vector<16x32xf32> -> vector<16x32xf32>
    %223 = vector.broadcast %155 : vector<1x32xf32> to vector<16x32xf32>
    %224 = arith.addf %222, %223 : vector<16x32xf32>
    %225 = arith.addf %151, %224 : vector<16x32xf32>
    %cst_78 = arith.constant dense<0.000000e+00> : vector<16xf32>
    %226 = vector.multi_reduction <add>, %225, %cst_78 [1] : vector<16x32xf32> to vector<16xf32>
    %227 = vector.shape_cast %226 : vector<16xf32> to vector<16x1xf32>
    %cst_79 = arith.constant 3.200000e+01 : f32
    %228 = vector.broadcast %cst_79 : f32 to vector<16x1xf32>
    %229 = arith.divf %227, %228 : vector<16x1xf32>
    %230 = vector.broadcast %229 : vector<16x1xf32> to vector<16x32xf32>
    %231 = arith.subf %225, %230 : vector<16x32xf32>
    %232 = arith.mulf %231, %231 : vector<16x32xf32>
    %cst_80 = arith.constant dense<0.000000e+00> : vector<16xf32>
    %233 = vector.multi_reduction <add>, %232, %cst_80 [1] : vector<16x32xf32> to vector<16xf32>
    %234 = vector.shape_cast %233 : vector<16xf32> to vector<16x1xf32>
    %cst_81 = arith.constant 3.200000e+01 : f32
    %235 = vector.broadcast %cst_81 : f32 to vector<16x1xf32>
    %236 = arith.divf %234, %235 : vector<16x1xf32>
    %237 = vector.broadcast %229 : vector<16x1xf32> to vector<16x32xf32>
    %238 = arith.subf %225, %237 : vector<16x32xf32>
    %cst_82 = arith.constant 9.99999974E-6 : f32
    %239 = vector.broadcast %cst_82 : f32 to vector<16x1xf32>
    %240 = arith.addf %236, %239 : vector<16x1xf32>
    %241 = math.rsqrt %240 : vector<16x1xf32>
    %242 = vector.broadcast %241 : vector<16x1xf32> to vector<16x32xf32>
    %243 = arith.mulf %238, %242 : vector<16x32xf32>
    %244 = vector.broadcast %156 : vector<1x32xf32> to vector<16x32xf32>
    %245 = arith.mulf %243, %244 : vector<16x32xf32>
    %246 = vector.broadcast %157 : vector<1x32xf32> to vector<16x32xf32>
    %247 = arith.addf %245, %246 : vector<16x32xf32>
    %248 = arith.truncf %247 : vector<16x32xf32> to vector<16x32xbf16>
    %cst_83 = arith.constant dense<0.000000e+00> : vector<16x128xf32>
    %249 = tpu.matmul %248, %160, %cst_83 {dimension_numbers = #tpu.dot_dimension_numbers<[1], [0], [0], [1], [0, 0, 1, 1], [], []>} : vector<16x32xbf16>, vector<32x128xbf16>, vector<16x128xf32> -> vector<16x128xf32>
    %250 = vector.broadcast %158 : vector<1x128xf32> to vector<16x128xf32>
    %251 = arith.addf %249, %250 : vector<16x128xf32>
    %cst_84 = arith.constant 5.000000e-01 : f32
    %252 = vector.broadcast %cst_84 : f32 to vector<16x128xf32>
    %253 = arith.mulf %252, %251 : vector<16x128xf32>
    %cst_85 = arith.constant 4.471500e-02 : f32
    %254 = vector.broadcast %cst_85 : f32 to vector<16x128xf32>
    %255 = arith.mulf %254, %251 : vector<16x128xf32>
    %256 = arith.mulf %255, %251 : vector<16x128xf32>
    %257 = arith.mulf %256, %251 : vector<16x128xf32>
    %258 = arith.addf %251, %257 : vector<16x128xf32>
    %cst_86 = arith.constant 0.797884583 : f32
    %259 = vector.broadcast %cst_86 : f32 to vector<16x128xf32>
    %260 = arith.mulf %259, %258 : vector<16x128xf32>
    %261 = math.tanh %260 : vector<16x128xf32>
    %cst_87 = arith.constant 1.000000e+00 : f32
    %262 = vector.broadcast %cst_87 : f32 to vector<16x128xf32>
    %263 = arith.addf %262, %261 : vector<16x128xf32>
    %264 = arith.mulf %253, %263 : vector<16x128xf32>
    %265 = arith.truncf %264 : vector<16x128xf32> to vector<16x128xbf16>
    %cst_88 = arith.constant dense<0.000000e+00> : vector<16x32xf32>
    %266 = tpu.matmul %265, %161, %cst_88 {dimension_numbers = #tpu.dot_dimension_numbers<[1], [1], [0], [0], [0, 0, 1, 0], [], []>} : vector<16x128xbf16>, vector<32x128xbf16>, vector<16x32xf32> -> vector<16x32xf32>
    %267 = vector.broadcast %159 : vector<1x32xf32> to vector<16x32xf32>
    %268 = arith.addf %266, %267 : vector<16x32xf32>
    %269 = arith.addf %225, %268 : vector<16x32xf32>
    %c16 = arith.constant 16 : index
    %c0_89 = arith.constant 0 : index
    %270 = vector.load %arg2[%c16, %c0_89] : memref<18x128xf32, #tpu.memory_space<vmem>>, vector<1x32xf32>
    %c17 = arith.constant 17 : index
    %c0_90 = arith.constant 0 : index
    %271 = vector.load %arg2[%c17, %c0_90] : memref<18x128xf32, #tpu.memory_space<vmem>>, vector<1x32xf32>
    %cst_91 = arith.constant dense<0.000000e+00> : vector<16xf32>
    %272 = vector.multi_reduction <add>, %269, %cst_91 [1] : vector<16x32xf32> to vector<16xf32>
    %273 = vector.shape_cast %272 : vector<16xf32> to vector<16x1xf32>
    %cst_92 = arith.constant 3.200000e+01 : f32
    %274 = vector.broadcast %cst_92 : f32 to vector<16x1xf32>
    %275 = arith.divf %273, %274 : vector<16x1xf32>
    %276 = vector.broadcast %275 : vector<16x1xf32> to vector<16x32xf32>
    %277 = arith.subf %269, %276 : vector<16x32xf32>
    %278 = arith.mulf %277, %277 : vector<16x32xf32>
    %cst_93 = arith.constant dense<0.000000e+00> : vector<16xf32>
    %279 = vector.multi_reduction <add>, %278, %cst_93 [1] : vector<16x32xf32> to vector<16xf32>
    %280 = vector.shape_cast %279 : vector<16xf32> to vector<16x1xf32>
    %cst_94 = arith.constant 3.200000e+01 : f32
    %281 = vector.broadcast %cst_94 : f32 to vector<16x1xf32>
    %282 = arith.divf %280, %281 : vector<16x1xf32>
    %283 = vector.broadcast %275 : vector<16x1xf32> to vector<16x32xf32>
    %284 = arith.subf %269, %283 : vector<16x32xf32>
    %cst_95 = arith.constant 9.99999974E-6 : f32
    %285 = vector.broadcast %cst_95 : f32 to vector<16x1xf32>
    %286 = arith.addf %282, %285 : vector<16x1xf32>
    %287 = math.rsqrt %286 : vector<16x1xf32>
    %288 = vector.broadcast %287 : vector<16x1xf32> to vector<16x32xf32>
    %289 = arith.mulf %284, %288 : vector<16x32xf32>
    %290 = vector.broadcast %270 : vector<1x32xf32> to vector<16x32xf32>
    %291 = arith.mulf %289, %290 : vector<16x32xf32>
    %292 = vector.broadcast %271 : vector<1x32xf32> to vector<16x32xf32>
    %293 = arith.addf %291, %292 : vector<16x32xf32>
    %c0_96 = arith.constant 0 : index
    %c768 = arith.constant 768 : index
    %294 = vector.load %arg5[%c0_96, %c768] : memref<32x896xbf16, #tpu.memory_space<vmem>>, vector<32x128xbf16>
    %295 = arith.truncf %293 : vector<16x32xf32> to vector<16x32xbf16>
    %cst_97 = arith.constant dense<0.000000e+00> : vector<16x128xf32>
    %296 = tpu.matmul %295, %294, %cst_97 {dimension_numbers = #tpu.dot_dimension_numbers<[1], [0], [0], [1], [0, 0, 1, 1], [], []>} : vector<16x32xbf16>, vector<32x128xbf16>, vector<16x128xf32> -> vector<16x128xf32>
    %c0_98 = arith.constant 0 : index
    %c0_99 = arith.constant 0 : index
    %297 = vector.load %arg6[%c0_98, %c0_99] : memref<16x128xf32, #tpu.memory_space<vmem>>, vector<16x128xf32>
    tpu.vector_store %arg6[%c0_98, %c0_99], %296 {strides = array<i32>} : memref<16x128xf32, #tpu.memory_space<vmem>>, vector<16x128xf32>,
    return
  }
}

</mosaic_0001>

<llo_original>
// kernel: omnibiota_forward.1
$region0: #{omnibiota_forward.1}
  #allocation0 [shape = 'u32[]', space=smem, size = 0x4, offset = 0x4, fixed_abs, tag = 'smem constant byte address 0x4 - core index']
  #allocation1 [shape = 'u32[72,128]{1,0:T(1,128)}', space=vmem, size = 0x9000, scoped, tag = 'internal scratch']
  %s0 = inlined_call_operand.vmem [shape: s32[16,1], index: 0, kind: input, shape index: {}]
  %s1 = inlined_call_operand.vmem [shape: f32[16,128], index: 1, kind: input, shape index: {}]
  %s2 = inlined_call_operand.hbm [shape: f32[18,128], index: 2, kind: input, shape index: {}]
  %s3 = inlined_call_operand.vmem [shape: bf16[64,32], index: 3, kind: input, shape index: {}]
  %s4 = inlined_call_operand.vmem [shape: bf16[64,64], index: 4, kind: input, shape index: {}]
  %s5 = inlined_call_operand.hbm [shape: bf16[32,896], index: 5, kind: input, shape index: {}]
  %s6 = inlined_call_operand.vmem [shape: f32[16,128], index: 6, kind: output, shape index: {}]
  %s7 = sld [smem:[#allocation0]]
  $region42: #{omnibiota_forward.1} parent=0
    _
  %s9 = ssub.s32 1, %s7
  %s10 = scalar_select 0, %s9, %s7
  $region1: #{omnibiota_forward.1} parent=0
    #allocation2 [shape = 'u8[12288]{0}', space=vmem, size = 0x3000, scoped, tag = 'input window, operand 2, single buffered']
    #allocation3 [shape = 's32[1]{0}', space=sflag, size = 0x4, scoped, tag = 'scoped memory for omnibiota_forward.1']
    #allocation4 [shape = 'u8[57344]{0}', space=vmem, size = 0xe000, scoped, tag = 'input window, operand 5, single buffered']
    #allocation5 [shape = 's32[1]{0}', space=sflag, size = 0x4, scoped, tag = 'scoped memory for omnibiota_forward.1']
    %11 = vsyncpa [#allocation3], 0
    %12 = vsyncpa [#allocation5], 0
    // Predicated region
    $region2: #{omnibiota_forward.1} parent=1 // pred_check
      _
    $region3: #{omnibiota_forward.1} parent=1 // pred_check_branch
      %14 = sbr.rel (0) target = $region5
    $region4: #{omnibiota_forward.1} parent=1 // pred_region
      _
    $region5: #{omnibiota_forward.1} parent=1 // pred_fallthru
      _
    // Predicated region
    $region6: #{omnibiota_forward.1} parent=1 // pred_check
      _
    $region7: #{omnibiota_forward.1} parent=1 // pred_check_branch
      %16 = sbr.rel (0) target = $region9
    $region8: #{omnibiota_forward.1} parent=1 // pred_region
      _
    $region9: #{omnibiota_forward.1} parent=1 // pred_fallthru
      _
    // Predicated region
    $region10: #{omnibiota_forward.1} parent=1 // pred_check
      _
    $region11: #{omnibiota_forward.1} parent=1 // pred_check_branch
      %18 = sbr.rel (0) target = $region13
    $region12: #{omnibiota_forward.1} parent=1 // pred_region
      %20 = vsyncadd [#allocation3], 0
      %s21 = sshll.u32 %s2, 4
      %s22 = int_to_ptr.hbm [resolvable:$true] %s21
      %s23 = sshll.u32 [#allocation2], 4
      %s24 = int_to_ptr.vmem [resolvable:$true] %s23
      %29 = dma.hbm_to_vmem [thread:$0]  %s22, 384, %s24, [#allocation3], 128, 128, 8
    $region13: #{omnibiota_forward.1} parent=1 // pred_fallthru
      _
    // Predicated region
    $region14: #{omnibiota_forward.1} parent=1 // pred_check
      _
    $region15: #{omnibiota_forward.1} parent=1 // pred_check_branch
      %31 = sbr.rel (0) target = $region17
    $region16: #{omnibiota_forward.1} parent=1 // pred_region
      _
    $region17: #{omnibiota_forward.1} parent=1 // pred_fallthru
      _
    // Predicated region
    $region18: #{omnibiota_forward.1} parent=1 // pred_check
      _
    $region19: #{omnibiota_forward.1} parent=1 // pred_check_branch
      %33 = sbr.rel (0) target = $region21
    $region20: #{omnibiota_forward.1} parent=1 // pred_region
      _
    $region21: #{omnibiota_forward.1} parent=1 // pred_fallthru
      _
    // Predicated region
    $region22: #{omnibiota_forward.1} parent=1 // pred_check
      _
    $region23: #{omnibiota_forward.1} parent=1 // pred_check_branch
      %35 = sbr.rel (0) target = $region25
    $region24: #{omnibiota_forward.1} parent=1 // pred_region
      %37 = vsyncadd [#allocation5], 0
      %s38 = sshll.u32 %s5, 4
      %s39 = int_to_ptr.hbm [resolvable:$true] %s38
      %s40 = sshll.u32 [#allocation4], 4
      %s41 = int_to_ptr.vmem [resolvable:$true] %s40
      %46 = dma.hbm_to_vmem [thread:$0]  %s39, 1792, %s41, [#allocation5], 448, 448, 28
    $region25: #{omnibiota_forward.1} parent=1 // pred_fallthru
      _
    // Predicated region
    $region26: #{omnibiota_forward.1} parent=1 // pred_check
      _
    $region27: #{omnibiota_forward.1} parent=1 // pred_check_branch
      %48 = sbr.rel (0) target = $region29
    $region28: #{omnibiota_forward.1} parent=1 // pred_region
      %50 = dma.done [#allocation3], 384
    $region29: #{omnibiota_forward.1} parent=1 // pred_fallthru
      _
    // Predicated region
    $region30: #{omnibiota_forward.1} parent=1 // pred_check
      _
    $region31: #{omnibiota_forward.1} parent=1 // pred_check_branch
      %52 = sbr.rel (0) target = $region33
    $region32: #{omnibiota_forward.1} parent=1 // pred_region
      %54 = dma.done [#allocation5], 1792
    $region33: #{omnibiota_forward.1} parent=1 // pred_fallthru
      _
    %v56 = vld [vmem:[%s0] sm:$0xff]
    %v57 = vld [vmem:[%s0 + $0x8] sm:$0xff]
    %v58 = vlaneseq
    %v59 = vand.u32 %v58, 127
    %60 = vset.pattern.permute.xlu0 0
    %61 = vperm.xlu0 %60, %v56
    %v62 = vpop.permute.xlu0 %61
    %63 = vset.pattern.permute.xlu0 0
    %64 = vperm.xlu0 %63, %v57
    %v65 = vpop.permute.xlu0 %64
    %vm66 = vcmp.eq.s32.totalorder %v59, %v62
    %vm67 = vcmp.eq.s32.totalorder %v59, %v65
    %v68 = vsel %vm66, 1.0, 0.0
    %v69 = vsel %vm67, 1.0, 0.0
    %v70 = vpack.c.bf16 %v69, %v68
    %v71 = vld [vmem:[%s3] sm:$0xf]
    %v72 = vld [vmem:[%s3 + $0x4] sm:$0xf]
    %v73 = vld [vmem:[%s3 + $0x8] sm:$0xf]
    %v74 = vld [vmem:[%s3 + $0xc] sm:$0xf]
    %v75 = vld [vmem:[%s3 + $0x10] sm:$0xf]
    %v76 = vld [vmem:[%s3 + $0x14] sm:$0xf]
    %v77 = vld [vmem:[%s3 + $0x18] sm:$0xf]
    %v78 = vld [vmem:[%s3 + $0x1c] sm:$0xf]
    %v87 = vunpack.c.l.b16 %v71
    %v88 = vunpack.c.l.b16 %v72
    %v89 = vunpack.c.l.b16 %v73
    %v90 = vunpack.c.l.b16 %v74
    %v91 = vunpack.c.l.b16 %v75
    %v92 = vunpack.c.l.b16 %v76
    %v93 = vunpack.c.l.b16 %v77
    %v94 = vunpack.c.l.b16 %v78
    %v95 = vpack.c.b16 %v88, %v87
    %v96 = vpack.c.b16 %v90, %v89
    %v97 = vpack.c.b16 %v92, %v91
    %v98 = vpack.c.b16 %v94, %v93
    %vm103 = vcmask 523264
    %v105 = vsel %vm103, %v70, 0
    %107 = vmatpush.bf16.msra.mxu0 0
    %108 = vmatpush.bf16.msra.mxu0 0
    %109 = vmatpush.bf16.msra.mxu0 0
    %110 = vmatpush.bf16.msra.mxu0 0
    %111 = vmatpush.bf16.msra.mxu0 %v98
    %112 = vmatpush.bf16.msra.mxu0 %v97
    %113 = vmatpush.bf16.msra.mxu0 %v96
    %114 = vmatpush.bf16.msra.mxu0 %v95
    %115 = vmatmul.bf16.gmra.mxu0 %v105
    %v116 = vpop.f32.mrf.mxu0
    %v117 = vadd.f32 0.0, %v116
    %v118 = vpop.f32.mrf.mxu0
    %v119 = vadd.f32 0.0, %v118
    %120 = vdwg.mxu0
    %v121 = vld [vmem:[%s1] sm:$0xff]
    %v122 = vld [vmem:[%s1 + $0x8] sm:$0xff]
    %v123 = vld [vmem:[%s4] sm:$0xf]
    %v124 = vld [vmem:[%s4 + $0x4] sm:$0xf]
    %v125 = vld [vmem:[%s4 + $0x8] sm:$0xf]
    %v126 = vld [vmem:[%s4 + $0xc] sm:$0xf]
    %v127 = vld [vmem:[%s4 + $0x10] sm:$0xf]
    %v128 = vld [vmem:[%s4 + $0x14] sm:$0xf]
    %v129 = vld [vmem:[%s4 + $0x18] sm:$0xf]
    %v130 = vld [vmem:[%s4 + $0x1c] sm:$0xf]
    %v131 = vlaneseq
    %v132 = vshrl.u32 %v131, 7
    %v133 = vadd.s32 %v132, 8
    %v134 = vshra.s32 %v132, 3
    %v135 = vshra.s32 %v133, 3
    %v136 = vand.u32 %v59, 15
    %v137 = vshra.s32 %v136, 3
    %vm138 = vcmp.eq.s32.totalorder %v134, %v137
    %vm139 = vcmp.eq.s32.totalorder %v135, %v137
    %v140 = vadd.s32 %v132, 16
    %v141 = vadd.s32 %v132, 24
    %v142 = vadd.s32 %v132, 32
    %v143 = vadd.s32 %v132, 40
    %v144 = vadd.s32 %v132, 48
    %v145 = vadd.s32 %v132, 56
    %v146 = vshra.s32 %v132, 4
    %v147 = vshra.s32 %v133, 4
    %v148 = vshra.s32 %v140, 4
    %v149 = vshra.s32 %v141, 4
    %v150 = vshra.s32 %v142, 4
    %v151 = vshra.s32 %v143, 4
    %v152 = vshra.s32 %v144, 4
    %v153 = vshra.s32 %v145, 4
    %v154 = vshra.s32 %v59, 3
    %vm155 = vcmp.eq.s32.totalorder %v146, %v154
    %vm156 = vcmp.eq.s32.totalorder %v147, %v154
    %vm157 = vcmp.eq.s32.totalorder %v148, %v154
    %vm158 = vcmp.eq.s32.totalorder %v149, %v154
    %vm159 = vcmp.eq.s32.totalorder %v150, %v154
    %vm160 = vcmp.eq.s32.totalorder %v151, %v154
    %vm161 = vcmp.eq.s32.totalorder %v152, %v154
    %vm162 = vcmp.eq.s32.totalorder %v153, %v154
    %v163 = vsel %vm155, 1.0, 0.0
    %v164 = vsel %vm156, 1.0, 0.0
    %v165 = vsel %vm157, 1.0, 0.0
    %v166 = vsel %vm158, 1.0, 0.0
    %v167 = vsel %vm159, 1.0, 0.0
    %v168 = vsel %vm160, 1.0, 0.0
    %v169 = vsel %vm161, 1.0, 0.0
    %v170 = vsel %vm162, 1.0, 0.0
    %v171 = vpack.c.bf16 %v164, %v163
    %v172 = vpack.c.bf16 %v166, %v165
    %v173 = vpack.c.bf16 %v168, %v167
    %v174 = vpack.c.bf16 %v170, %v169
    %v175 = vld [vmem:[#allocation2] sm:$0x1]
    %v176 = vld [vmem:[#allocation2 + $0x1] sm:$0x1]
    %v177 = vld [vmem:[#allocation2 + $0x2] sm:$0x1]
    %v178 = vld [vmem:[#allocation2 + $0x3] sm:$0x1]
    %v179 = vld [vmem:[#allocation2 + $0x4] sm:$0x1]
    %v180 = vld [vmem:[#allocation2 + $0x5] sm:$0x1]
    %v181 = vld [vmem:[#allocation2 + $0x6] sm:$0x1]
    %v182 = vld [vmem:[#allocation2 + $0x7] sm:$0x1]
    %v183 = vld [vmem:[#allocation4] sm:$0xf]
    %v184 = vld [vmem:[#allocation4 + $0x1c] sm:$0xf]
    %v185 = vld [vmem:[#allocation4 + $0x38] sm:$0xf]
    %v186 = vld [vmem:[#allocation4 + $0x54] sm:$0xf]
    %v187 = vld [vmem:[#allocation4 + $0x4] sm:$0xf]
    %v188 = vld [vmem:[#allocation4 + $0x20] sm:$0xf]
    %v189 = vld [vmem:[#allocation4 + $0x3c] sm:$0xf]
    %v190 = vld [vmem:[#allocation4 + $0x58] sm:$0xf]
    %v191 = vld [vmem:[#allocation4 + $0x8] sm:$0xf]
    %v192 = vld [vmem:[#allocation4 + $0x24] sm:$0xf]
    %v193 = vld [vmem:[#allocation4 + $0x40] sm:$0xf]
    %v194 = vld [vmem:[#allocation4 + $0x5c] sm:$0xf]
    %vm195 = vcmask 261120
    %v196 = vsel %vm195, %v117, 0.0
    %197 = vadd.xlane.f32.xlu0 %v196
    %v198 = vpop.xlane.xlu0 %197
    %v199 = vsel %vm195, %v119, 0.0
    %200 = vadd.xlane.f32.xlu0 %v199
    %v201 = vpop.xlane.xlu0 %200
    %v202 = vrcp.pop 32.0
    %v203 = vmul.f32 32.0, %v202
    %v204 = vsub.f32 1.0, %v203
    %v205 = vmul.f32 %v202, %v204
    %v206 = vadd.f32 %v202, %v205
    %vm207 = vweird.f32 %v202
    %v208 = vsel %vm207, %v202, %v206
    %v209 = vmul.f32 %v198, %v208
    %v210 = vmul.f32 %v201, %v208
    %v211 = vsub.f32 %v117, %v209
    %v212 = vsub.f32 %v119, %v210
    %v213 = vmul.f32 %v211, %v211
    %v214 = vmul.f32 %v212, %v212
    %v215 = vsel %vm195, %v213, 0.0
    %216 = vadd.xlane.f32.xlu0 %v215
    %v217 = vpop.xlane.xlu0 %216
    %v218 = vsel %vm195, %v214, 0.0
    %219 = vadd.xlane.f32.xlu0 %v218
    %v220 = vpop.xlane.xlu0 %219
    %v221 = vmul.f32 %v217, %v208
    %v222 = vmul.f32 %v220, %v208
    %v223 = vadd.f32 %v221, 1e-05
    %v224 = vadd.f32 %v222, 1e-05
    %v225 = vrsqrt.pop %v223
    %v226 = vmul.f32 %v225, %v223
    %v227 = vmul.f32 %v226, %v225
    %v228 = vmul.f32 0.5, %v227
    %v229 = vsub.f32 1.5, %v228
    %v230 = vmul.f32 %v225, %v229
    %vm231 = vweird.f32 %v223
    %vm232 = vweird.f32 %v225
    %vm233 = vmor %vm231, %vm232
    %v234 = vsel %vm233, %v225, %v230
    %v235 = vrsqrt.pop %v224
    %v236 = vmul.f32 %v235, %v224
    %v237 = vmul.f32 %v236, %v235
    %v238 = vmul.f32 0.5, %v237
    %v239 = vsub.f32 1.5, %v238
    %v240 = vmul.f32 %v235, %v239
    %vm241 = vweird.f32 %v224
    %vm242 = vweird.f32 %v235
    %vm243 = vmor %vm241, %vm242
    %v244 = vsel %vm243, %v235, %v240
    %v245 = vmul.f32 %v211, %v234
    %v246 = vmul.f32 %v212, %v244
    %v247 = vperm.slane %v175, 0
    %v248 = vmul.f32 %v245, %v247
    %v249 = vmul.f32 %v246, %v247
    %v250 = vperm.slane %v176, 0
    %v251 = vadd.f32 %v248, %v250
    %v252 = vadd.f32 %v249, %v250
    %v253 = vpack.c.bf16 %v252, %v251
    %v254 = vperm.slane %v177, 0
    %v259 = vunpack.c.l.b16 %v191
    %v260 = vunpack.c.l.b16 %v192
    %v261 = vunpack.c.l.b16 %v193
    %v262 = vunpack.c.l.b16 %v194
    %v263 = vpack.c.b16 %v260, %v259
    %v264 = vpack.c.b16 %v262, %v261
    %v268 = vsel %vm195, %v253, 0
    %270 = vmatpush.bf16.msra.mxu0 0
    %271 = vmatpush.bf16.msra.mxu0 0
    %272 = vmatpush.bf16.msra.mxu0 0
    %273 = vmatpush.bf16.msra.mxu0 0
    %274 = vmatpush.bf16.msra.mxu0 0
    %275 = vmatpush.bf16.msra.mxu0 0
    %276 = vmatpush.bf16.msra.mxu0 %v264
    %277 = vmatpush.bf16.msra.mxu0 %v263
    %278 = vmatmul.bf16.gmra.mxu0 %v268
    %v279 = vpop.f32.mrf.mxu0
    %v280 = vadd.f32 %v254, %v279
    %v281 = vpop.f32.mrf.mxu0
    %v282 = vadd.f32 %v254, %v281
    %283 = vdwg.mxu0
    %v284 = vpack.c.bf16 %v282, %v280
    %v293 = vunpack.c.l.b16 %v123
    %v294 = vunpack.c.l.b16 %v124
    %v295 = vunpack.c.l.b16 %v125
    %v296 = vunpack.c.l.b16 %v126
    %v297 = vunpack.c.l.b16 %v127
    %v298 = vunpack.c.l.b16 %v128
    %v299 = vunpack.c.l.b16 %v129
    %v300 = vunpack.c.l.b16 %v130
    %v301 = vpack.c.b16 %v294, %v293
    %v302 = vpack.c.b16 %v296, %v295
    %v303 = vpack.c.b16 %v298, %v297
    %v304 = vpack.c.b16 %v300, %v299
    %v310 = vsel %vm103, %v284, 0
    %312 = vmatpush.bf16.msra.mxu0 0
    %313 = vmatpush.bf16.msra.mxu0 0
    %314 = vmatpush.bf16.msra.mxu0 0
    %315 = vmatpush.bf16.msra.mxu0 0
    %316 = vmatpush.bf16.msra.mxu0 %v304
    %317 = vmatpush.bf16.msra.mxu0 %v303
    %318 = vmatpush.bf16.msra.mxu0 %v302
    %319 = vmatpush.bf16.msra.mxu0 %v301
    %320 = vmatmul.bf16.gmra.mxu0 %v310
    %v321 = vpop.f32.mrf.mxu0
    %v322 = vadd.f32 0.0, %v321
    %v323 = vpop.f32.mrf.mxu0
    %v324 = vadd.f32 0.0, %v323
    %325 = vdwg.mxu0
    %v326 = vmul.f32 %v280, %v121
    %v327 = vmul.f32 %v282, %v122
    %330 = vrot.lane.b32.xlu0 %v121, 64
    %v331 = vpop.permute.xlu0 %330
    %332 = vrot.lane.b32.xlu0 %v122, 64
    %v333 = vpop.permute.xlu0 %332
    %v336 = vmul.f32 %v322, %v331
    %v337 = vmul.f32 %v324, %v333
    %v338 = vadd.f32 %v326, %v336
    %v339 = vadd.f32 %v327, %v337
    %348 = vrot.lane.b32.xlu0 %v163, 32
    %v349 = vpop.permute.xlu0 %348
    %350 = vrot.lane.b32.xlu0 %v164, 32
    %v351 = vpop.permute.xlu0 %350
    %352 = vrot.lane.b32.xlu0 %v165, 32
    %v353 = vpop.permute.xlu0 %352
    %354 = vrot.lane.b32.xlu0 %v166, 32
    %v355 = vpop.permute.xlu0 %354
    %356 = vrot.lane.b32.xlu0 %v167, 32
    %v357 = vpop.permute.xlu0 %356
    %358 = vrot.lane.b32.xlu0 %v168, 32
    %v359 = vpop.permute.xlu0 %358
    %360 = vrot.lane.b32.xlu0 %v169, 32
    %v361 = vpop.permute.xlu0 %360
    %362 = vrot.lane.b32.xlu0 %v170, 32
    %v363 = vpop.permute.xlu0 %362
    %v372 = vmul.f32 %v338, %v349
    %v373 = vmul.f32 %v339, %v351
    %v374 = vmul.f32 %v338, %v353
    %v375 = vmul.f32 %v339, %v355
    %v376 = vmul.f32 %v338, %v357
    %v377 = vmul.f32 %v339, %v359
    %v378 = vmul.f32 %v338, %v361
    %v379 = vmul.f32 %v339, %v363
    %v380 = vpack.c.bf16 %v373, %v372
    %v381 = vpack.c.bf16 %v375, %v374
    %v382 = vpack.c.bf16 %v377, %v376
    %v383 = vpack.c.bf16 %v379, %v378
    %384 = vrot.lane.b32.xlu0 %v163, 64
    %v385 = vpop.permute.xlu0 %384
    %386 = vrot.lane.b32.xlu0 %v164, 64
    %v387 = vpop.permute.xlu0 %386
    %388 = vrot.lane.b32.xlu0 %v165, 64
    %v389 = vpop.permute.xlu0 %388
    %390 = vrot.lane.b32.xlu0 %v166, 64
    %v391 = vpop.permute.xlu0 %390
    %392 = vrot.lane.b32.xlu0 %v167, 64
    %v393 = vpop.permute.xlu0 %392
    %394 = vrot.lane.b32.xlu0 %v168, 64
    %v395 = vpop.permute.xlu0 %394
    %396 = vrot.lane.b32.xlu0 %v169, 64
    %v397 = vpop.permute.xlu0 %396
    %398 = vrot.lane.b32.xlu0 %v170, 64
    %v399 = vpop.permute.xlu0 %398
    %v408 = vmul.f32 %v280, %v385
    %v409 = vmul.f32 %v282, %v387
    %v410 = vmul.f32 %v280, %v389
    %v411 = vmul.f32 %v282, %v391
    %v412 = vmul.f32 %v280, %v393
    %v413 = vmul.f32 %v282, %v395
    %v414 = vmul.f32 %v280, %v397
    %v415 = vmul.f32 %v282, %v399
    %v416 = vpack.c.bf16 %v409, %v408
    %v417 = vpack.c.bf16 %v411, %v410
    %v418 = vpack.c.bf16 %v413, %v412
    %v419 = vpack.c.bf16 %v415, %v414
    %v420 = vpack.c.bf16 %v339, %v338
    %425 = vrot.lane.b32.xlu0 %v380, 96
    %v426 = vpop.permute.xlu0 %425
    %427 = vrot.lane.b32.xlu0 %v381, 96
    %v428 = vpop.permute.xlu0 %427
    %429 = vrot.lane.b32.xlu0 %v382, 96
    %v430 = vpop.permute.xlu0 %429
    %431 = vrot.lane.b32.xlu0 %v383, 96
    %v432 = vpop.permute.xlu0 %431
    %v434 = vsel %vm195, %v420, 0
    %v437 = vsel %vm195, %v426, 0
    %v440 = vsel %vm195, %v428, 0
    %v443 = vsel %vm195, %v430, 0
    %v446 = vsel %vm195, %v432, 0
    %448 = vmatpush.bf16.xpose.msra.mxu0 0
    %449 = vmatpush.bf16.xpose.msra.mxu0 0
    %450 = vmatpush.bf16.xpose.msra.mxu0 0
    %451 = vmatpush.bf16.xpose.msra.mxu0 0
    %452 = vmatpush.bf16.xpose.msra.mxu0 %v446
    %453 = vmatpush.bf16.xpose.msra.mxu0 %v443
    %454 = vmatpush.bf16.xpose.msra.mxu0 %v440
    %455 = vmatpush.bf16.xpose.msra.mxu0 %v437
    %456 = vmatmul.bf16.gmra.mxu0 %v434
    %v457 = vpop.f32.mrf.mxu0
    %v458 = vadd.f32 0.0, %v457
    %v459 = vpop.f32.mrf.mxu0
    %v460 = vadd.f32 0.0, %v459
    %461 = vdwg.mxu0
    %v462 = vsel %vm138, %v458, -1e+30
    %v463 = vsel %vm139, %v460, -1e+30
    %v464 = vsel %vm103, %v462, -inf
    %465 = vmax.xlane.f32.xlu0 %v464
    %v466 = vpop.xlane.xlu0 %465
    %v467 = vsel %vm103, %v463, -inf
    %468 = vmax.xlane.f32.xlu0 %v467
    %v469 = vpop.xlane.xlu0 %468
    %v470 = vsub.f32 %v458, %v466
    %v471 = vsub.f32 %v460, %v469
    %v472 = vmul.f32 %v470, 1.442695
    %v473 = vpow.pop %v472
    %v474 = vmul.f32 %v471, 1.442695
    %v475 = vpow.pop %v474
    %v476 = vsel %vm138, %v473, 0.0
    %v477 = vsel %vm139, %v475, 0.0
    %v478 = vpack.c.bf16 %v477, %v476
    %483 = vrot.lane.b32.xlu0 %v416, 64
    %v484 = vpop.permute.xlu0 %483
    %485 = vrot.lane.b32.xlu0 %v417, 64
    %v486 = vpop.permute.xlu0 %485
    %487 = vrot.lane.b32.xlu0 %v418, 64
    %v488 = vpop.permute.xlu0 %487
    %489 = vrot.lane.b32.xlu0 %v419, 64
    %v490 = vpop.permute.xlu0 %489
    %v496 = vsel %vm103, %v478, 0
    %498 = vmatpush.bf16.msra.mxu0 0
    %499 = vmatpush.bf16.msra.mxu0 0
    %500 = vmatpush.bf16.msra.mxu0 0
    %501 = vmatpush.bf16.msra.mxu0 0
    %502 = vmatpush.bf16.msra.mxu0 %v490
    %503 = vmatpush.bf16.msra.mxu0 %v488
    %504 = vmatpush.bf16.msra.mxu0 %v486
    %505 = vmatpush.bf16.msra.mxu0 %v484
    %506 = vmatmul.bf16.gmra.mxu0 %v496
    %v507 = vpop.f32.mrf.mxu0
    %v508 = vadd.f32 0.0, %v507
    %v509 = vpop.f32.mrf.mxu0
    %v510 = vadd.f32 0.0, %v509
    %511 = vdwg.mxu0
    %512 = vmatpush.bf16.msra.mxu0 0
    %513 = vmatpush.bf16.msra.mxu0 0
    %514 = vmatpush.bf16.msra.mxu0 0
    %515 = vmatpush.bf16.msra.mxu0 0
    %516 = vmatpush.bf16.msra.mxu0 %v174
    %517 = vmatpush.bf16.msra.mxu0 %v173
    %518 = vmatpush.bf16.msra.mxu0 %v172
    %519 = vmatpush.bf16.msra.mxu0 %v171
    %520 = vmatmul.bf16.gmra.mxu0 %v496
    %v521 = vpop.f32.mrf.mxu0
    %v522 = vadd.f32 0.0, %v521
    %v523 = vpop.f32.mrf.mxu0
    %v524 = vadd.f32 0.0, %v523
    %525 = vdwg.mxu0
    %v526 = vrcp.pop %v522
    %v527 = vrcp.pop %v524
    %v528 = vmul.f32 %v508, %v526
    %v529 = vmul.f32 %v510, %v527
    %v530 = vpack.c.bf16 %v529, %v528
    %v531 = vperm.slane %v178, 0
    %532 = vrot.lane.b32.xlu0 %v263, 32
    %v533 = vpop.permute.xlu0 %532
    %534 = vrot.lane.b32.xlu0 %v264, 32
    %v535 = vpop.permute.xlu0 %534
    %v539 = vsel %vm195, %v530, 0
    %541 = vmatpush.bf16.msra.mxu0 0
    %542 = vmatpush.bf16.msra.mxu0 0
    %543 = vmatpush.bf16.msra.mxu0 0
    %544 = vmatpush.bf16.msra.mxu0 0
    %545 = vmatpush.bf16.msra.mxu0 0
    %546 = vmatpush.bf16.msra.mxu0 0
    %547 = vmatpush.bf16.msra.mxu0 %v535
    %548 = vmatpush.bf16.msra.mxu0 %v533
    %549 = vmatmul.bf16.gmra.mxu0 %v539
    %v550 = vpop.f32.mrf.mxu0
    %v551 = vadd.f32 %v531, %v550
    %v552 = vpop.f32.mrf.mxu0
    %v553 = vadd.f32 %v531, %v552
    %554 = vdwg.mxu0
    %v555 = vadd.f32 %v117, %v551
    %v556 = vadd.f32 %v119, %v553
    %v557 = vsel %vm195, %v555, 0.0
    %558 = vadd.xlane.f32.xlu0 %v557
    %v559 = vpop.xlane.xlu0 %558
    %v560 = vsel %vm195, %v556, 0.0
    %561 = vadd.xlane.f32.xlu0 %v560
    %v562 = vpop.xlane.xlu0 %561
    %v563 = vmul.f32 %v559, %v208
    %v564 = vmul.f32 %v562, %v208
    %v565 = vsub.f32 %v555, %v563
    %v566 = vsub.f32 %v556, %v564
    %v567 = vmul.f32 %v565, %v565
    %v568 = vmul.f32 %v566, %v566
    %v569 = vsel %vm195, %v567, 0.0
    %570 = vadd.xlane.f32.xlu0 %v569
    %v571 = vpop.xlane.xlu0 %570
    %v572 = vsel %vm195, %v568, 0.0
    %573 = vadd.xlane.f32.xlu0 %v572
    %v574 = vpop.xlane.xlu0 %573
    %v575 = vmul.f32 %v571, %v208
    %v576 = vmul.f32 %v574, %v208
    %v577 = vadd.f32 %v575, 1e-05
    %v578 = vadd.f32 %v576, 1e-05
    %v579 = vrsqrt.pop %v577
    %v580 = vmul.f32 %v579, %v577
    %v581 = vmul.f32 %v580, %v579
    %v582 = vmul.f32 0.5, %v581
    %v583 = vsub.f32 1.5, %v582
    %v584 = vmul.f32 %v579, %v583
    %vm585 = vweird.f32 %v577
    %vm586 = vweird.f32 %v579
    %vm587 = vmor %vm585, %vm586
    %v588 = vsel %vm587, %v579, %v584
    %v589 = vrsqrt.pop %v578
    %v590 = vmul.f32 %v589, %v578
    %v591 = vmul.f32 %v590, %v589
    %v592 = vmul.f32 0.5, %v591
    %v593 = vsub.f32 1.5, %v592
    %v594 = vmul.f32 %v589, %v593
    %vm595 = vweird.f32 %v578
    %vm596 = vweird.f32 %v589
    %vm597 = vmor %vm595, %vm596
    %v598 = vsel %vm597, %v589, %v594
    %v599 = vmul.f32 %v565, %v588
    %v600 = vmul.f32 %v566, %v598
    %v601 = vperm.slane %v179, 0
    %v602 = vmul.f32 %v599, %v601
    %v603 = vmul.f32 %v600, %v601
    %v604 = vperm.slane %v180, 0
    %v605 = vadd.f32 %v602, %v604
    %v606 = vadd.f32 %v603, %v604
    %v607 = vpack.c.bf16 %v606, %v605
    %v608 = vperm.slane %v181, 0
    %v613 = vunpack.c.l.b16 %v183
    %v614 = vunpack.c.l.b16 %v184
    %v615 = vunpack.c.l.b16 %v185
    %v616 = vunpack.c.l.b16 %v186
    %v617 = vpack.c.b16 %v614, %v613
    %v618 = vpack.c.b16 %v616, %v615
    %v622 = vsel %vm195, %v607, 0
    %624 = vmatpush.bf16.msra.mxu0 0
    %625 = vmatpush.bf16.msra.mxu0 0
    %626 = vmatpush.bf16.msra.mxu0 0
    %627 = vmatpush.bf16.msra.mxu0 0
    %628 = vmatpush.bf16.msra.mxu0 0
    %629 = vmatpush.bf16.msra.mxu0 0
    %630 = vmatpush.bf16.msra.mxu0 %v618
    %631 = vmatpush.bf16.msra.mxu0 %v617
    %632 = vmatmul.bf16.gmra.mxu0 %v622
    %v633 = vpop.f32.mrf.mxu0
    %v634 = vadd.f32 %v608, %v633
    %v635 = vpop.f32.mrf.mxu0
    %v636 = vadd.f32 %v608, %v635
    %637 = vdwg.mxu0
    %v638 = vmul.f32 %v634, 0.5
    %v639 = vmul.f32 %v636, 0.5
    %v640 = vmul.f32 %v634, 0.044715
    %v641 = vmul.f32 %v636, 0.044715
    %v642 = vmul.f32 %v640, %v634
    %v643 = vmul.f32 %v641, %v636
    %v644 = vmul.f32 %v642, %v634
    %v645 = vmul.f32 %v643, %v636
    %v646 = vadd.f32 %v634, %v644
    %v647 = vadd.f32 %v636, %v645
    %v648 = vmul.f32 %v646, 0.7978846
    %v649 = vmul.f32 %v647, 0.7978846
    %v650 = vtanh.pop %v648
    %v651 = vtanh.pop %v649
    %v652 = vadd.f32 %v650, 1.0
    %v653 = vadd.f32 %v651, 1.0
    %v654 = vmul.f32 %v638, %v652
    %v655 = vmul.f32 %v639, %v653
    %v656 = vpack.c.bf16 %v655, %v654
    %v657 = vperm.slane %v182, 0
    %v662 = vunpack.c.l.b16 %v187
    %v663 = vunpack.c.l.b16 %v188
    %v664 = vunpack.c.l.b16 %v189
    %v665 = vunpack.c.l.b16 %v190
    %v666 = vpack.c.b16 %v663, %v662
    %v667 = vpack.c.b16 %v665, %v664
    %670 = vmatpush.bf16.xpose.msra.mxu0 0
    %671 = vmatpush.bf16.xpose.msra.mxu0 0
    %672 = vmatpush.bf16.xpose.msra.mxu0 0
    %673 = vmatpush.bf16.xpose.msra.mxu0 0
    %674 = vmatpush.bf16.xpose.msra.mxu0 0
    %675 = vmatpush.bf16.xpose.msra.mxu0 0
    %676 = vmatpush.bf16.xpose.msra.mxu0 %v667
    %677 = vmatpush.bf16.xpose.msra.mxu0 %v666
    %678 = vmatmul.bf16.gmra.mxu0 %v656
    %v679 = vpop.f32.mrf.mxu0
    %v680 = vadd.f32 %v657, %v679
    %v681 = vpop.f32.mrf.mxu0
    %v682 = vadd.f32 %v657, %v681
    %683 = vdwg.mxu0
    %v684 = vadd.f32 %v555, %v680
    %v685 = vadd.f32 %v556, %v682
    %v686 = vld [vmem:[#allocation2 + $0x8] sm:$0x1]
    %v687 = vld [vmem:[#allocation2 + $0x9] sm:$0x1]
    %v688 = vld [vmem:[#allocation2 + $0xa] sm:$0x1]
    %v689 = vld [vmem:[#allocation2 + $0xb] sm:$0x1]
    %v690 = vld [vmem:[#allocation2 + $0xc] sm:$0x1]
    %v691 = vld [vmem:[#allocation2 + $0xd] sm:$0x1]
    %v692 = vld [vmem:[#allocation2 + $0xe] sm:$0x1]
    %v693 = vld [vmem:[#allocation2 + $0xf] sm:$0x1]
    %v694 = vld [vmem:[#allocation4 + $0xc] sm:$0xf]
    %v695 = vld [vmem:[#allocation4 + $0x28] sm:$0xf]
    %v696 = vld [vmem:[#allocation4 + $0x44] sm:$0xf]
    %v697 = vld [vmem:[#allocation4 + $0x60] sm:$0xf]
    %v698 = vld [vmem:[#allocation4 + $0x10] sm:$0xf]
    %v699 = vld [vmem:[#allocation4 + $0x2c] sm:$0xf]
    %v700 = vld [vmem:[#allocation4 + $0x48] sm:$0xf]
    %v701 = vld [vmem:[#allocation4 + $0x64] sm:$0xf]
    %v702 = vld [vmem:[#allocation4 + $0x14] sm:$0xf]
    %v703 = vld [vmem:[#allocation4 + $0x30] sm:$0xf]
    %v704 = vld [vmem:[#allocation4 + $0x4c] sm:$0xf]
    %v705 = vld [vmem:[#allocation4 + $0x68] sm:$0xf]
    %v706 = vsel %vm195, %v684, 0.0
    %707 = vadd.xlane.f32.xlu0 %v706
    %v708 = vpop.xlane.xlu0 %707
    %v709 = vsel %vm195, %v685, 0.0
    %710 = vadd.xlane.f32.xlu0 %v709
    %v711 = vpop.xlane.xlu0 %710
    %v712 = vmul.f32 %v708, %v208
    %v713 = vmul.f32 %v711, %v208
    %v714 = vsub.f32 %v684, %v712
    %v715 = vsub.f32 %v685, %v713
    %v716 = vmul.f32 %v714, %v714
    %v717 = vmul.f32 %v715, %v715
    %v718 = vsel %vm195, %v716, 0.0
    %719 = vadd.xlane.f32.xlu0 %v718
    %v720 = vpop.xlane.xlu0 %719
    %v721 = vsel %vm195, %v717, 0.0
    %722 = vadd.xlane.f32.xlu0 %v721
    %v723 = vpop.xlane.xlu0 %722
    %v724 = vmul.f32 %v720, %v208
    %v725 = vmul.f32 %v723, %v208
    %v726 = vadd.f32 %v724, 1e-05
    %v727 = vadd.f32 %v725, 1e-05
    %v728 = vrsqrt.pop %v726
    %v729 = vmul.f32 %v728, %v726
    %v730 = vmul.f32 %v729, %v728
    %v731 = vmul.f32 0.5, %v730
    %v732 = vsub.f32 1.5, %v731
    %v733 = vmul.f32 %v728, %v732
    %vm734 = vweird.f32 %v726
    %vm735 = vweird.f32 %v728
    %vm736 = vmor %vm734, %vm735
    %v737 = vsel %vm736, %v728, %v733
    %v738 = vrsqrt.pop %v727
    %v739 = vmul.f32 %v738, %v727
    %v740 = vmul.f32 %v739, %v738
    %v741 = vmul.f32 0.5, %v740
    %v742 = vsub.f32 1.5, %v741
    %v743 = vmul.f32 %v738, %v742
    %vm744 = vweird.f32 %v727
    %vm745 = vweird.f32 %v738
    %vm746 = vmor %vm744, %vm745
    %v747 = vsel %vm746, %v738, %v743
    %v748 = vmul.f32 %v714, %v737
    %v749 = vmul.f32 %v715, %v747
    %v750 = vperm.slane %v686, 0
    %v751 = vmul.f32 %v748, %v750
    %v752 = vmul.f32 %v749, %v750
    %v753 = vperm.slane %v687, 0
    %v754 = vadd.f32 %v751, %v753
    %v755 = vadd.f32 %v752, %v753
    %v756 = vpack.c.bf16 %v755, %v754
    %v757 = vperm.slane %v688, 0
    %v762 = vunpack.c.l.b16 %v702
    %v763 = vunpack.c.l.b16 %v703
    %v764 = vunpack.c.l.b16 %v704
    %v765 = vunpack.c.l.b16 %v705
    %v766 = vpack.c.b16 %v763, %v762
    %v767 = vpack.c.b16 %v765, %v764
    %v771 = vsel %vm195, %v756, 0
    %773 = vmatpush.bf16.msra.mxu0 0
    %774 = vmatpush.bf16.msra.mxu0 0
    %775 = vmatpush.bf16.msra.mxu0 0
    %776 = vmatpush.bf16.msra.mxu0 0
    %777 = vmatpush.bf16.msra.mxu0 0
    %778 = vmatpush.bf16.msra.mxu0 0
    %779 = vmatpush.bf16.msra.mxu0 %v767
    %780 = vmatpush.bf16.msra.mxu0 %v766
    %781 = vmatmul.bf16.gmra.mxu0 %v771
    %v782 = vpop.f32.mrf.mxu0
    %v783 = vadd.f32 %v757, %v782
    %v784 = vpop.f32.mrf.mxu0
    %v785 = vadd.f32 %v757, %v784
    %786 = vdwg.mxu0
    %v787 = vpack.c.bf16 %v785, %v783
    %v789 = vsel %vm103, %v787, 0
    %791 = vmatpush.bf16.msra.mxu0 0
    %792 = vmatpush.bf16.msra.mxu0 0
    %793 = vmatpush.bf16.msra.mxu0 0
    %794 = vmatpush.bf16.msra.mxu0 0
    %795 = vmatpush.bf16.msra.mxu0 %v304
    %796 = vmatpush.bf16.msra.mxu0 %v303
    %797 = vmatpush.bf16.msra.mxu0 %v302
    %798 = vmatpush.bf16.msra.mxu0 %v301
    %799 = vmatmul.bf16.gmra.mxu0 %v789
    %v800 = vpop.f32.mrf.mxu0
    %v801 = vadd.f32 0.0, %v800
    %v802 = vpop.f32.mrf.mxu0
    %v803 = vadd.f32 0.0, %v802
    %804 = vdwg.mxu0
    %v805 = vmul.f32 %v783, %v121
    %v806 = vmul.f32 %v785, %v122
    %v807 = vmul.f32 %v801, %v331
    %v808 = vmul.f32 %v803, %v333
    %v809 = vadd.f32 %v805, %v807
    %v810 = vadd.f32 %v806, %v808
    %v811 = vmul.f32 %v809, %v349
    %v812 = vmul.f32 %v810, %v351
    %v813 = vmul.f32 %v809, %v353
    %v814 = vmul.f32 %v810, %v355
    %v815 = vmul.f32 %v809, %v357
    %v816 = vmul.f32 %v810, %v359
    %v817 = vmul.f32 %v809, %v361
    %v818 = vmul.f32 %v810, %v363
    %v819 = vpack.c.bf16 %v812, %v811
    %v820 = vpack.c.bf16 %v814, %v813
    %v821 = vpack.c.bf16 %v816, %v815
    %v822 = vpack.c.bf16 %v818, %v817
    %v823 = vmul.f32 %v783, %v385
    %v824 = vmul.f32 %v785, %v387
    %v825 = vmul.f32 %v783, %v389
    %v826 = vmul.f32 %v785, %v391
    %v827 = vmul.f32 %v783, %v393
    %v828 = vmul.f32 %v785, %v395
    %v829 = vmul.f32 %v783, %v397
    %v830 = vmul.f32 %v785, %v399
    %v831 = vpack.c.bf16 %v824, %v823
    %v832 = vpack.c.bf16 %v826, %v825
    %v833 = vpack.c.bf16 %v828, %v827
    %v834 = vpack.c.bf16 %v830, %v829
    %v835 = vpack.c.bf16 %v810, %v809
    %840 = vrot.lane.b32.xlu0 %v819, 96
    %v841 = vpop.permute.xlu0 %840
    %842 = vrot.lane.b32.xlu0 %v820, 96
    %v843 = vpop.permute.xlu0 %842
    %844 = vrot.lane.b32.xlu0 %v821, 96
    %v845 = vpop.permute.xlu0 %844
    %846 = vrot.lane.b32.xlu0 %v822, 96
    %v847 = vpop.permute.xlu0 %846
    %v849 = vsel %vm195, %v835, 0
    %v852 = vsel %vm195, %v841, 0
    %v855 = vsel %vm195, %v843, 0
    %v858 = vsel %vm195, %v845, 0
    %v861 = vsel %vm195, %v847, 0
    %863 = vmatpush.bf16.xpose.msra.mxu0 0
    %864 = vmatpush.bf16.xpose.msra.mxu0 0
    %865 = vmatpush.bf16.xpose.msra.mxu0 0
    %866 = vmatpush.bf16.xpose.msra.mxu0 0
    %867 = vmatpush.bf16.xpose.msra.mxu0 %v861
    %868 = vmatpush.bf16.xpose.msra.mxu0 %v858
    %869 = vmatpush.bf16.xpose.msra.mxu0 %v855
    %870 = vmatpush.bf16.xpose.msra.mxu0 %v852
    %871 = vmatmul.bf16.gmra.mxu0 %v849
    %v872 = vpop.f32.mrf.mxu0
    %v873 = vadd.f32 0.0, %v872
    %v874 = vpop.f32.mrf.mxu0
    %v875 = vadd.f32 0.0, %v874
    %876 = vdwg.mxu0
    %v877 = vsel %vm138, %v873, -1e+30
    %v878 = vsel %vm139, %v875, -1e+30
    %v879 = vsel %vm103, %v877, -inf
    %880 = vmax.xlane.f32.xlu0 %v879
    %v881 = vpop.xlane.xlu0 %880
    %v882 = vsel %vm103, %v878, -inf
    %883 = vmax.xlane.f32.xlu0 %v882
    %v884 = vpop.xlane.xlu0 %883
    %v885 = vsub.f32 %v873, %v881
    %v886 = vsub.f32 %v875, %v884
    %v887 = vmul.f32 %v885, 1.442695
    %v888 = vpow.pop %v887
    %v889 = vmul.f32 %v886, 1.442695
    %v890 = vpow.pop %v889
    %v891 = vsel %vm138, %v888, 0.0
    %v892 = vsel %vm139, %v890, 0.0
    %v893 = vpack.c.bf16 %v892, %v891
    %898 = vrot.lane.b32.xlu0 %v831, 64
    %v899 = vpop.permute.xlu0 %898
    %900 = vrot.lane.b32.xlu0 %v832, 64
    %v901 = vpop.permute.xlu0 %900
    %902 = vrot.lane.b32.xlu0 %v833, 64
    %v903 = vpop.permute.xlu0 %902
    %904 = vrot.lane.b32.xlu0 %v834, 64
    %v905 = vpop.permute.xlu0 %904
    %v911 = vsel %vm103, %v893, 0
    %913 = vmatpush.bf16.msra.mxu0 0
    %914 = vmatpush.bf16.msra.mxu0 0
    %915 = vmatpush.bf16.msra.mxu0 0
    %916 = vmatpush.bf16.msra.mxu0 0
    %917 = vmatpush.bf16.msra.mxu0 %v905
    %918 = vmatpush.bf16.msra.mxu0 %v903
    %919 = vmatpush.bf16.msra.mxu0 %v901
    %920 = vmatpush.bf16.msra.mxu0 %v899
    %921 = vmatmul.bf16.gmra.mxu0 %v911
    %v922 = vpop.f32.mrf.mxu0
    %v923 = vadd.f32 0.0, %v922
    %v924 = vpop.f32.mrf.mxu0
    %v925 = vadd.f32 0.0, %v924
    %926 = vdwg.mxu0
    %927 = vmatpush.bf16.msra.mxu0 0
    %928 = vmatpush.bf16.msra.mxu0 0
    %929 = vmatpush.bf16.msra.mxu0 0
    %930 = vmatpush.bf16.msra.mxu0 0
    %931 = vmatpush.bf16.msra.mxu0 %v174
    %932 = vmatpush.bf16.msra.mxu0 %v173
    %933 = vmatpush.bf16.msra.mxu0 %v172
    %934 = vmatpush.bf16.msra.mxu0 %v171
    %935 = vmatmul.bf16.gmra.mxu0 %v911
    %v936 = vpop.f32.mrf.mxu0
    %v937 = vadd.f32 0.0, %v936
    %v938 = vpop.f32.mrf.mxu0
    %v939 = vadd.f32 0.0, %v938
    %940 = vdwg.mxu0
    %v941 = vrcp.pop %v937
    %v942 = vrcp.pop %v939
    %v943 = vmul.f32 %v923, %v941
    %v944 = vmul.f32 %v925, %v942
    %v945 = vpack.c.bf16 %v944, %v943
    %v946 = vperm.slane %v689, 0
    %947 = vrot.lane.b32.xlu0 %v766, 32
    %v948 = vpop.permute.xlu0 %947
    %949 = vrot.lane.b32.xlu0 %v767, 32
    %v950 = vpop.permute.xlu0 %949
    %v954 = vsel %vm195, %v945, 0
    %956 = vmatpush.bf16.msra.mxu0 0
    %957 = vmatpush.bf16.msra.mxu0 0
    %958 = vmatpush.bf16.msra.mxu0 0
    %959 = vmatpush.bf16.msra.mxu0 0
    %960 = vmatpush.bf16.msra.mxu0 0
    %961 = vmatpush.bf16.msra.mxu0 0
    %962 = vmatpush.bf16.msra.mxu0 %v950
    %963 = vmatpush.bf16.msra.mxu0 %v948
    %964 = vmatmul.bf16.gmra.mxu0 %v954
    %v965 = vpop.f32.mrf.mxu0
    %v966 = vadd.f32 %v946, %v965
    %v967 = vpop.f32.mrf.mxu0
    %v968 = vadd.f32 %v946, %v967
    %969 = vdwg.mxu0
    %v970 = vadd.f32 %v684, %v966
    %v971 = vadd.f32 %v685, %v968
    %v972 = vsel %vm195, %v970, 0.0
    %973 = vadd.xlane.f32.xlu0 %v972
    %v974 = vpop.xlane.xlu0 %973
    %v975 = vsel %vm195, %v971, 0.0
    %976 = vadd.xlane.f32.xlu0 %v975
    %v977 = vpop.xlane.xlu0 %976
    %v978 = vmul.f32 %v974, %v208
    %v979 = vmul.f32 %v977, %v208
    %v980 = vsub.f32 %v970, %v978
    %v981 = vsub.f32 %v971, %v979
    %v982 = vmul.f32 %v980, %v980
    %v983 = vmul.f32 %v981, %v981
    %v984 = vsel %vm195, %v982, 0.0
    %985 = vadd.xlane.f32.xlu0 %v984
    %v986 = vpop.xlane.xlu0 %985
    %v987 = vsel %vm195, %v983, 0.0
    %988 = vadd.xlane.f32.xlu0 %v987
    %v989 = vpop.xlane.xlu0 %988
    %v990 = vmul.f32 %v986, %v208
    %v991 = vmul.f32 %v989, %v208
    %v992 = vadd.f32 %v990, 1e-05
    %v993 = vadd.f32 %v991, 1e-05
    %v994 = vrsqrt.pop %v992
    %v995 = vmul.f32 %v994, %v992
    %v996 = vmul.f32 %v995, %v994
    %v997 = vmul.f32 0.5, %v996
    %v998 = vsub.f32 1.5, %v997
    %v999 = vmul.f32 %v994, %v998
    %vm1000 = vweird.f32 %v992
    %vm1001 = vweird.f32 %v994
    %vm1002 = vmor %vm1000, %vm1001
    %v1003 = vsel %vm1002, %v994, %v999
    %v1004 = vrsqrt.pop %v993
    %v1005 = vmul.f32 %v1004, %v993
    %v1006 = vmul.f32 %v1005, %v1004
    %v1007 = vmul.f32 0.5, %v1006
    %v1008 = vsub.f32 1.5, %v1007
    %v1009 = vmul.f32 %v1004, %v1008
    %vm1010 = vweird.f32 %v993
    %vm1011 = vweird.f32 %v1004
    %vm1012 = vmor %vm1010, %vm1011
    %v1013 = vsel %vm1012, %v1004, %v1009
    %v1014 = vmul.f32 %v980, %v1003
    %v1015 = vmul.f32 %v981, %v1013
    %v1016 = vperm.slane %v690, 0
    %v1017 = vmul.f32 %v1014, %v1016
    %v1018 = vmul.f32 %v1015, %v1016
    %v1019 = vperm.slane %v691, 0
    %v1020 = vadd.f32 %v1017, %v1019
    %v1021 = vadd.f32 %v1018, %v1019
    %v1022 = vpack.c.bf16 %v1021, %v1020
    %v1023 = vperm.slane %v692, 0
    %v1028 = vunpack.c.l.b16 %v694
    %v1029 = vunpack.c.l.b16 %v695
    %v1030 = vunpack.c.l.b16 %v696
    %v1031 = vunpack.c.l.b16 %v697
    %v1032 = vpack.c.b16 %v1029, %v1028
    %v1033 = vpack.c.b16 %v1031, %v1030
    %v1037 = vsel %vm195, %v1022, 0
    %1039 = vmatpush.bf16.msra.mxu0 0
    %1040 = vmatpush.bf16.msra.mxu0 0
    %1041 = vmatpush.bf16.msra.mxu0 0
    %1042 = vmatpush.bf16.msra.mxu0 0
    %1043 = vmatpush.bf16.msra.mxu0 0
    %1044 = vmatpush.bf16.msra.mxu0 0
    %1045 = vmatpush.bf16.msra.mxu0 %v1033
    %1046 = vmatpush.bf16.msra.mxu0 %v1032
    %1047 = vmatmul.bf16.gmra.mxu0 %v1037
    %v1048 = vpop.f32.mrf.mxu0
    %v1049 = vadd.f32 %v1023, %v1048
    %v1050 = vpop.f32.mrf.mxu0
    %v1051 = vadd.f32 %v1023, %v1050
    %1052 = vdwg.mxu0
    %v1053 = vmul.f32 %v1049, 0.5
    %v1054 = vmul.f32 %v1051, 0.5
    %v1055 = vmul.f32 %v1049, 0.044715
    %v1056 = vmul.f32 %v1051, 0.044715
    %v1057 = vmul.f32 %v1055, %v1049
    %v1058 = vmul.f32 %v1056, %v1051
    %v1059 = vmul.f32 %v1057, %v1049
    %v1060 = vmul.f32 %v1058, %v1051
    %v1061 = vadd.f32 %v1049, %v1059
    %v1062 = vadd.f32 %v1051, %v1060
    %v1063 = vmul.f32 %v1061, 0.7978846
    %v1064 = vmul.f32 %v1062, 0.7978846
    %v1065 = vtanh.pop %v1063
    %v1066 = vtanh.pop %v1064
    %v1067 = vadd.f32 %v1065, 1.0
    %v1068 = vadd.f32 %v1066, 1.0
    %v1069 = vmul.f32 %v1053, %v1067
    %v1070 = vmul.f32 %v1054, %v1068
    %v1071 = vpack.c.bf16 %v1070, %v1069
    %v1072 = vperm.slane %v693, 0
    %v1077 = vunpack.c.l.b16 %v698
    %v1078 = vunpack.c.l.b16 %v699
    %v1079 = vunpack.c.l.b16 %v700
    %v1080 = vunpack.c.l.b16 %v701
    %v1081 = vpack.c.b16 %v1078, %v1077
    %v1082 = vpack.c.b16 %v1080, %v1079
    %1085 = vmatpush.bf16.xpose.msra.mxu0 0
    %1086 = vmatpush.bf16.xpose.msra.mxu0 0
    %1087 = vmatpush.bf16.xpose.msra.mxu0 0
    %1088 = vmatpush.bf16.xpose.msra.mxu0 0
    %1089 = vmatpush.bf16.xpose.msra.mxu0 0
    %1090 = vmatpush.bf16.xpose.msra.mxu0 0
    %1091 = vmatpush.bf16.xpose.msra.mxu0 %v1082
    %1092 = vmatpush.bf16.xpose.msra.mxu0 %v1081
    %1093 = vmatmul.bf16.gmra.mxu0 %v1071
    %v1094 = vpop.f32.mrf.mxu0
    %v1095 = vadd.f32 %v1072, %v1094
    %v1096 = vpop.f32.mrf.mxu0
    %v1097 = vadd.f32 %v1072, %v1096
    %1098 = vdwg.mxu0
    %v1099 = vadd.f32 %v970, %v1095
    %v1100 = vadd.f32 %v971, %v1097
    %v1101 = vld [vmem:[#allocation2 + $0x10] sm:$0x1]
    %v1102 = vld [vmem:[#allocation2 + $0x11] sm:$0x1]
    %v1103 = vsel %vm195, %v1099, 0.0
    %1104 = vadd.xlane.f32.xlu0 %v1103
    %v1105 = vpop.xlane.xlu0 %1104
    %v1106 = vsel %vm195, %v1100, 0.0
    %1107 = vadd.xlane.f32.xlu0 %v1106
    %v1108 = vpop.xlane.xlu0 %1107
    %v1109 = vmul.f32 %v1105, %v208
    %v1110 = vmul.f32 %v1108, %v208
    %v1111 = vsub.f32 %v1099, %v1109
    %v1112 = vsub.f32 %v1100, %v1110
    %v1113 = vmul.f32 %v1111, %v1111
    %v1114 = vmul.f32 %v1112, %v1112
    %v1115 = vsel %vm195, %v1113, 0.0
    %1116 = vadd.xlane.f32.xlu0 %v1115
    %v1117 = vpop.xlane.xlu0 %1116
    %v1118 = vsel %vm195, %v1114, 0.0
    %1119 = vadd.xlane.f32.xlu0 %v1118
    %v1120 = vpop.xlane.xlu0 %1119
    %v1121 = vmul.f32 %v1117, %v208
    %v1122 = vmul.f32 %v1120, %v208
    %v1123 = vadd.f32 %v1121, 1e-05
    %v1124 = vadd.f32 %v1122, 1e-05
    %v1125 = vrsqrt.pop %v1123
    %v1126 = vmul.f32 %v1125, %v1123
    %v1127 = vmul.f32 %v1126, %v1125
    %v1128 = vmul.f32 0.5, %v1127
    %v1129 = vsub.f32 1.5, %v1128
    %v1130 = vmul.f32 %v1125, %v1129
    %vm1131 = vweird.f32 %v1123
    %vm1132 = vweird.f32 %v1125
    %vm1133 = vmor %vm1131, %vm1132
    %v1134 = vsel %vm1133, %v1125, %v1130
    %v1135 = vrsqrt.pop %v1124
    %v1136 = vmul.f32 %v1135, %v1124
    %v1137 = vmul.f32 %v1136, %v1135
    %v1138 = vmul.f32 0.5, %v1137
    %v1139 = vsub.f32 1.5, %v1138
    %v1140 = vmul.f32 %v1135, %v1139
    %vm1141 = vweird.f32 %v1124
    %vm1142 = vweird.f32 %v1135
    %vm1143 = vmor %vm1141, %vm1142
    %v1144 = vsel %vm1143, %v1135, %v1140
    %v1145 = vmul.f32 %v1111, %v1134
    %v1146 = vmul.f32 %v1112, %v1144
    %v1147 = vperm.slane %v1101, 0
    %v1148 = vmul.f32 %v1145, %v1147
    %v1149 = vmul.f32 %v1146, %v1147
    %v1150 = vperm.slane %v1102, 0
    %v1151 = vadd.f32 %v1148, %v1150
    %v1152 = vadd.f32 %v1149, %v1150
    %v1153 = vld [vmem:[#allocation4 + $0x18] sm:$0xf]
    %v1154 = vld [vmem:[#allocation4 + $0x34] sm:$0xf]
    %v1155 = vld [vmem:[#allocation4 + $0x50] sm:$0xf]
    %v1156 = vld [vmem:[#allocation4 + $0x6c] sm:$0xf]
    %v1157 = vpack.c.bf16 %v1152, %v1151
    %v1162 = vunpack.c.l.b16 %v1153
    %v1163 = vunpack.c.l.b16 %v1154
    %v1164 = vunpack.c.l.b16 %v1155
    %v1165 = vunpack.c.l.b16 %v1156
    %v1166 = vpack.c.b16 %v1163, %v1162
    %v1167 = vpack.c.b16 %v1165, %v1164
    %v1171 = vsel %vm195, %v1157, 0
    %1173 = vmatpush.bf16.msra.mxu0 0
    %1174 = vmatpush.bf16.msra.mxu0 0
    %1175 = vmatpush.bf16.msra.mxu0 0
    %1176 = vmatpush.bf16.msra.mxu0 0
    %1177 = vmatpush.bf16.msra.mxu0 0
    %1178 = vmatpush.bf16.msra.mxu0 0
    %1179 = vmatpush.bf16.msra.mxu0 %v1167
    %1180 = vmatpush.bf16.msra.mxu0 %v1166
    %1181 = vmatmul.bf16.gmra.mxu0 %v1171
    %v1182 = vpop.f32.mrf.mxu0
    %v1183 = vadd.f32 0.0, %v1182
    %v1184 = vpop.f32.mrf.mxu0
    %v1185 = vadd.f32 0.0, %v1184
    %1186 = vdwg.mxu0
    %1187 = vst [vmem:[%s6] sm:$0xff] %v1183
    %1188 = vst [vmem:[%s6 + $0x8] sm:$0xff] %v1185
    // Predicated region
    $region34: #{omnibiota_forward.1} parent=1 // pred_check
      _
    $region35: #{omnibiota_forward.1} parent=1 // pred_check_branch
      %1190 = sbr.rel (0) target = $region37
    $region36: #{omnibiota_forward.1} parent=1 // pred_region
      _
    $region37: #{omnibiota_forward.1} parent=1 // pred_fallthru
      _
    // Predicated region
    $region38: #{omnibiota_forward.1} parent=1 // pred_check
      _
    $region39: #{omnibiota_forward.1} parent=1 // pred_check_branch
      %1192 = sbr.rel (0) target = $region41
    $region40: #{omnibiota_forward.1} parent=1 // pred_region
      _
    $region41: #{omnibiota_forward.1} parent=1 // pred_fallthru
      _
    %1193 = vsyncpa [#allocation3], 1
    %1194 = vsyncpa [#allocation5], 1

</llo_original>
